<compile_context>
chip_gen: v6e
topology: v6e:2x2x1
jax: 0.10.0
libtpu: 0.0.40
codegen_flags: <defaults>
</compile_context>

<pallas_src>
import jax
import jax.numpy as jnp
from jax.experimental import pallas as pl
from jax.experimental.pallas import tpu as pltpu


def _decoder_reverse_kernel(ctx_ref, hid_ref, q_ref, c0_ref,
                            wq_ref, wuc_ref, wuh_ref, bu_ref, wg4_ref,
                            wgc_ref, wgh_ref, wga_ref, bg_ref,
                            h_out_ref, c_out_ref):
    TB, d, H = q_ref.shape
    mm_dtype = wq_ref.dtype          # f32 (default) or bf16 (v6e/v7x MXU path)

    ctx = ctx_ref[...].astype(mm_dtype)                 # (TB, H)
    hid = hid_ref[...].astype(mm_dtype)                 # (TB, H)
    q = q_ref[...]                                      # (TB, d, H) in mm_dtype

    # Attention bias u = g2(ctx) + bg2 + g3(hid): two K=H MXU matmuls, f32 accumulate.
    u = (jnp.dot(ctx, wuc_ref[...], preferred_element_type=jnp.float32)
         + jnp.dot(hid, wuh_ref[...], preferred_element_type=jnp.float32)
         + bu_ref[...])                                 # (TB, H) f32

    # g1(question): one (TB*d, H) @ (H, H) MXU matmul for the whole batch tile.
    # (If production d is not a multiple of 8, pad d upstream and mask the padded
    #  rows to -inf before the softmax to avoid per-step relayout copies.)
    e = jnp.dot(q.reshape(TB * d, H), wq_ref[...],
                preferred_element_type=jnp.float32).reshape(TB, d, H)

    # EUP (tanh over TB*d*H) is the saturating slot for realistic H; keep it f32
    # for accuracy (bf16 element-wise helps on v6e/v7x but degrades on v5e).
    t = jnp.tanh(e + u[:, None, :])                     # (TB, d, H) f32

    # g4 projection (N=1): VPU multiply + lane reduce. bg4 dropped (constant logit
    # offset cancels in the softmax).
    s = jnp.sum(t * wg4_ref[...], axis=-1, keepdims=True)      # (TB, d, 1)

    # softmax over d — exact division (only TB scalars per tile; the approximate
    # reciprocal saved nothing and cost ~3 digits of accuracy).
    s_max = jnp.max(s, axis=1, keepdims=True)
    p = jnp.exp(s - s_max)
    a = p / jnp.sum(p, axis=1, keepdims=True)           # (TB, d, 1)

    # attention combination: broadcast multiply + sublane reduce (no MXU, no transpose).
    attn = jnp.sum(a * q.astype(jnp.float32), axis=1)   # (TB, H) f32

    # Single-step LSTM pre-activations, PyTorch gate order i, f, g, o:
    #   gates = [ctx|attn] @ W_ih^T + h0 @ W_hh^T + (b_ih + b_hh)
    gates = (jnp.dot(ctx, wgc_ref[...], preferred_element_type=jnp.float32)
             + jnp.dot(hid, wgh_ref[...], preferred_element_type=jnp.float32)
             + jnp.dot(attn.astype(mm_dtype), wga_ref[...],
                       preferred_element_type=jnp.float32)
             + bg_ref[...])                             # (TB, 4H) f32

    gi = jax.nn.sigmoid(gates[:, 0 * H:1 * H])
    gf = jax.nn.sigmoid(gates[:, 1 * H:2 * H])
    gg = jnp.tanh(gates[:, 2 * H:3 * H])
    go = jax.nn.sigmoid(gates[:, 3 * H:4 * H])

    c_new = gf * c0_ref[...] + gi * gg
    h_new = go * jnp.tanh(c_new)

    h_out_ref[...] = h_new.astype(h_out_ref.dtype)
    c_out_ref[...] = c_new.astype(c_out_ref.dtype)


def prepare_decoder_reverse_weights(params, matmul_dtype=jnp.float32):
    """Pack / transpose the module weights ONCE (reused for every decode step).

    matmul_dtype=jnp.bfloat16 gives the full-rate MXU + half-DMA path on v6e/v7x;
    biases, the g4 row (VPU path) and all element-wise math stay float32."""
    H = params["Wg1"].shape[0]
    mm = matmul_dtype
    W_ih, W_hh = params["W_ih"], params["W_hh"]
    return {
        "wq":  jnp.asarray(params["Wg1"].T, mm),                    # (H, H)   g1 (question)
        "wuc": jnp.asarray(params["Wg2"].T, mm),                    # (H, H)   g2 (context)
        "wuh": jnp.asarray(params["Wg3"].T, mm),                    # (H, H)   g3 (hidden)
        "bu":  jnp.asarray(params["bg2"].reshape(1, H), jnp.float32),
        "wg4": jnp.asarray(params["Wg4"].reshape(1, 1, H), jnp.float32),
        "wgc": jnp.asarray(W_ih[:, :H].T, mm),                      # (H, 4H)  LSTM, ctx half
        "wgh": jnp.asarray(W_hh.T, mm),                             # (H, 4H)  LSTM, hidden
        "wga": jnp.asarray(W_ih[:, H:].T, mm),                      # (H, 4H)  LSTM, attn half
        "bg":  jnp.asarray((params["b_ih"] + params["b_hh"]).reshape(1, 4 * H),
                           jnp.float32),
    }


def _choose_tb(batch, d, H, q_itemsize=4):
    """Batch tile: multiple of 8, divides batch, prefers >=2 grid steps (so the
    'parallel' axis can shard across v7x's two TensorCores) and keeps the
    question tile + f32 intermediates inside a ~40 MiB activation budget
    (v7x has only 64 MiB VMEM total)."""
    if batch <= 8:
        return batch                         # single block == full array dims (legal for any H)
    budget = 40 * 1024 * 1024
    per_row = (2 * q_itemsize + 3 * 4) * d * H + 64 * H * 4
    cap = max(8, budget // max(per_row, 1))
    for want_two_steps in (True, False):
        for tb in (512, 256, 128, 64, 32, 16, 8):
            if tb <= cap and batch % tb == 0 and (not want_two_steps or batch // tb >= 2):
                return tb
    return batch


def decoder_reverse_pallas(context, question, hidden, mem, prep, tb=None,
                           donate_mem=False):
    """context (B,H), question (B,d,H), hidden/mem (1,B,H) -> (output (B,1,H), mem (1,B,H)).

    `prep` comes from prepare_decoder_reverse_weights() (computed once, reused per step).
    donate_mem=True aliases the incoming cell state to the new one (in-place update for a
    token-by-token decode loop) — the passed `mem` buffer is consumed."""
    B, H = context.shape
    d = question.shape[1]
    mm_dtype = prep["wq"].dtype
    q_isz = jnp.dtype(mm_dtype).itemsize

    # bf16 path: question is the dominant DMA — keep it narrow in HBM. (Ideally the
    # caller already supplies bf16 activations so this cast is a no-op.)
    if question.dtype != mm_dtype:
        question = question.astype(mm_dtype)

    if tb is None:
        tb = _choose_tb(B, d, H, q_isz)
    assert B % tb == 0, f"batch tile {tb} must divide batch {B}"
    grid = (B // tb,)

    # VMEM sizing: single-buffered weights + double-buffered activation blocks + f32
    # intermediates (e, t, ...), with headroom; capped below v7x's 64 MiB physical VMEM,
    # floored above v5e's 16 MiB scoped default.
    weight_bytes = 15 * H * H * q_isz + 6 * H * 4
    act_bytes = 2 * (4 * tb * H * 4 + tb * d * H * q_isz)
    interm_bytes = 3 * tb * d * H * 4
    vmem_limit = int(min(56 << 20,
                         max(2 * weight_bytes + act_bytes + interm_bytes + (4 << 20),
                             32 << 20)))

    weights = (prep["wq"], prep["wuc"], prep["wuh"], prep["bu"], prep["wg4"],
               prep["wgc"], prep["wgh"], prep["wga"], prep["bg"])

    def _run(single_buffer_weights):
        def wspec(shape, imap):
            if single_buffer_weights:
                # grid-invariant weights: one VMEM buffer instead of two
                return pl.BlockSpec(shape, imap, pipeline_mode=pl.Buffered(1))
            return pl.BlockSpec(shape, imap)

        in_specs = [
            pl.BlockSpec((tb, H), lambda b: (b, 0)),                # context
            pl.BlockSpec((None, tb, H), lambda b: (0, b, 0)),       # hidden (1,B,H) -> (tb,H)
            pl.BlockSpec((tb, d, H), lambda b: (b, 0, 0)),          # question
            pl.BlockSpec((None, tb, H), lambda b: (0, b, 0)),       # mem / c0
            wspec((H, H), lambda b: (0, 0)),                        # Wg1^T
            wspec((H, H), lambda b: (0, 0)),                        # Wg2^T
            wspec((H, H), lambda b: (0, 0)),                        # Wg3^T
            wspec((1, H), lambda b: (0, 0)),                        # bg2
            wspec((1, 1, H), lambda b: (0, 0, 0)),                  # Wg4 row
            wspec((H, 4 * H), lambda b: (0, 0)),                    # W_ih(ctx)^T
            wspec((H, 4 * H), lambda b: (0, 0)),                    # W_hh^T
            wspec((H, 4 * H), lambda b: (0, 0)),                    # W_ih(attn)^T
            wspec((1, 4 * H), lambda b: (0, 0)),                    # b_ih + b_hh
        ]
        out_specs = (
            pl.BlockSpec((tb, H), lambda b: (b, 0)),                # h1 (lane-dense slab)
            pl.BlockSpec((None, tb, H), lambda b: (0, b, 0)),       # c1 -> (1,B,H)
        )
        return pl.pallas_call(
            _decoder_reverse_kernel,
            out_shape=(jax.ShapeDtypeStruct((B, H), jnp.float32),
                       jax.ShapeDtypeStruct((1, B, H), jnp.float32)),
            grid_spec=pltpu.PrefetchScalarGridSpec(
                num_scalar_prefetch=0, grid=grid,
                in_specs=in_specs, out_specs=out_specs),
            input_output_aliases=({3: 1} if donate_mem else {}),
            compiler_params=pltpu.CompilerParams(
                dimension_semantics=("parallel",),
                vmem_limit_bytes=vmem_limit),
        )(context, hidden, question, mem, *weights)

    try:
        h_out, c_out = _run(True)
    except Exception:
        # pl.Buffered(1) pipeline_mode unsupported on this jax build -> default buffering.
        h_out, c_out = _run(False)

    return h_out.reshape(B, 1, H), c_out


def decoder_reverse_reference(context, question, hidden, mem, params):
    """Literal JAX translation of the PyTorch forward (incl. the attention repeat/view)."""
    Wg1, Wg2, bg2, Wg3, Wg4, bg4 = (params[k] for k in
                                    ("Wg1", "Wg2", "bg2", "Wg3", "Wg4", "bg4"))
    W_ih, W_hh, b_ih, b_hh = (params[k] for k in ("W_ih", "W_hh", "b_ih", "b_hh"))
    B, H = context.shape
    d = question.shape[1]

    # attention_1.score / forward
    output_g3 = jnp.matmul(jnp.transpose(hidden, (1, 0, 2)), Wg3.T)        # (B,1,H)
    output_g2 = (context @ Wg2.T + bg2)[:, None, :]                        # (B,1,H)
    output_g1 = jnp.matmul(question, Wg1.T)                                # (B,d,H)
    output_ = output_g2 + output_g3
    output_repeat = jnp.tile(output_, (1, d, 1)).reshape(B, H, -1)
    output_g = output_repeat + output_g1.reshape(B, H, -1)
    output_1 = jnp.tanh(output_g)
    output_final = jnp.matmul(output_1.reshape(B, -1, H), Wg4.T) + bg4     # (B,d,1)
    attn_w = jax.nn.softmax(output_final, axis=1)
    attn_combination = jnp.matmul(jnp.transpose(attn_w, (0, 2, 1)), question)  # (B,1,H)

    # single-step LSTM (batch_first, seq_len=1), PyTorch gate order i,f,g,o
    x = jnp.concatenate([context[:, None, :], attn_combination], axis=2)[:, 0, :]  # (B,2H)
    h0, c0 = hidden[0], mem[0]
    gates = x @ W_ih.T + b_ih + h0 @ W_hh.T + b_hh
    gi = jax.nn.sigmoid(gates[:, 0 * H:1 * H])
    gf = jax.nn.sigmoid(gates[:, 1 * H:2 * H])
    gg = jnp.tanh(gates[:, 2 * H:3 * H])
    go = jax.nn.sigmoid(gates[:, 3 * H:4 * H])
    c1 = gf * c0 + gi * gg
    h1 = go * jnp.tanh(c1)
    return h1[:, None, :], c1[None, :, :]


def init_params(key, hidden_units):
    """Deterministic synthetic init (PyTorch-like uniform(-1/sqrt(H), 1/sqrt(H)))."""
    H = hidden_units
    k = 1.0 / jnp.sqrt(jnp.float32(H))
    keys = jax.random.split(key, 10)
    u = lambda kk, shape: jax.random.uniform(kk, shape, jnp.float32, -k, k)
    return {
        "Wg1": u(keys[0], (H, H)),           # linear_g1 (no bias)
        "Wg2": u(keys[1], (H, H)),           # linear_g2
        "bg2": u(keys[2], (H,)),
        "Wg3": u(keys[3], (H, H)),           # linear_g3 (no bias)
        "Wg4": u(keys[4], (1, H)),           # linear_g4
        "bg4": u(keys[5], (1,)),
        "W_ih": u(keys[6], (4 * H, 2 * H)),  # LSTM input weights (i,f,g,o)
        "W_hh": u(keys[7], (4 * H, H)),      # LSTM hidden weights
        "b_ih": u(keys[8], (4 * H,)),
        "b_hh": u(keys[9], (4 * H,)),
    }


if __name__ == "__main__":
    B, d, H = 2, 8, 32
    key = jax.random.PRNGKey(0)
    kp, kc, kq, kh, km = jax.random.split(key, 5)

    params = init_params(kp, H)
    context = jax.random.normal(kc, (B, H), jnp.float32)
    question = jax.random.normal(kq, (B, d, H), jnp.float32)
    hidden = jax.random.normal(kh, (1, B, H), jnp.float32)
    mem = jax.random.normal(km, (1, B, H), jnp.float32)

    ref_out, ref_mem = decoder_reverse_reference(context, question, hidden, mem, params)

    # ---- default f32 MXU path (exact softmax division -> tightened tolerance) ----
    prep = prepare_decoder_reverse_weights(params)          # packed ONCE, reused per step
    out, mem_out = decoder_reverse_pallas(context, question, hidden, mem, prep)
    out = jax.block_until_ready(out)
    mem_out = jax.block_until_ready(mem_out)
    assert out.shape == (B, 1, H), out.shape
    assert mem_out.shape == (1, B, H), mem_out.shape
    assert jnp.allclose(out, ref_out, rtol=1e-3, atol=1e-3), \
        f"h max abs err {jnp.max(jnp.abs(out - ref_out))}"
    assert jnp.allclose(mem_out, ref_mem, rtol=1e-3, atol=1e-3), \
        f"c max abs err {jnp.max(jnp.abs(mem_out - ref_mem))}"

    # ---- bf16 MXU path (v6e/v7x) with in-place cell-state aliasing ----
    prep_bf16 = prepare_decoder_reverse_weights(params, matmul_dtype=jnp.bfloat16)
    mem_donated = mem + 0.0                                  # fresh buffer; consumed below
    out_b, mem_b = decoder_reverse_pallas(context, question.astype(jnp.bfloat16),
                                          hidden, mem_donated, prep_bf16,
                                          donate_mem=True)
    out_b = jax.block_until_ready(out_b)
    mem_b = jax.block_until_ready(mem_b)
    assert jnp.allclose(out_b, ref_out, rtol=6e-2, atol=6e-2), \
        f"bf16 h max abs err {jnp.max(jnp.abs(out_b - ref_out))}"
    assert jnp.allclose(mem_b, ref_mem, rtol=6e-2, atol=6e-2), \
        f"bf16 c max abs err {jnp.max(jnp.abs(mem_b - ref_mem))}"

    print("KERNEL_OK")
</pallas_src>

<mosaic_0001>
module attributes {stable_mosaic.version = 11 : i64} {
  func.func @_decoder_reverse_kernel(%arg0: i32, %arg1: memref<2x32xf32, #tpu.memory_space<vmem>>, %arg2: memref<1x2x32xf32, #tpu.memory_space<vmem>>, %arg3: memref<2x8x32xf32, #tpu.memory_space<vmem>>, %arg4: memref<1x2x32xf32, #tpu.memory_space<vmem>>, %arg5: memref<32x32xf32, #tpu.memory_space<vmem>>, %arg6: memref<32x32xf32, #tpu.memory_space<vmem>>, %arg7: memref<32x32xf32, #tpu.memory_space<vmem>>, %arg8: memref<1x32xf32, #tpu.memory_space<vmem>>, %arg9: memref<1x1x32xf32, #tpu.memory_space<vmem>>, %arg10: memref<32x128xf32, #tpu.memory_space<vmem>>, %arg11: memref<32x128xf32, #tpu.memory_space<vmem>>, %arg12: memref<32x128xf32, #tpu.memory_space<vmem>>, %arg13: memref<1x128xf32, #tpu.memory_space<vmem>>, %arg14: memref<2x32xf32, #tpu.memory_space<vmem>>, %arg15: memref<1x2x32xf32, #tpu.memory_space<vmem>>) attributes {dimension_semantics = [#tpu.dimension_semantics<parallel>], iteration_bounds = array<i64: 1>, scalar_prefetch = 0 : i64, scratch_operands = 0 : i64, tpu.core_type = #tpu.core_type<tc>, window_params = [{transform_indices = @transform_0, window_bounds = array<i64: 2, 32>}, {transform_indices = @transform_1, window_bounds = array<i64: 1, 2, 32>}, {transform_indices = @transform_2, window_bounds = array<i64: 2, 8, 32>}, {transform_indices = @transform_3, window_bounds = array<i64: 1, 2, 32>}, {pipeline_mode = #tpu.pipeline_mode<synchronous>, transform_indices = @transform_4, window_bounds = array<i64: 32, 32>}, {pipeline_mode = #tpu.pipeline_mode<synchronous>, transform_indices = @transform_5, window_bounds = array<i64: 32, 32>}, {pipeline_mode = #tpu.pipeline_mode<synchronous>, transform_indices = @transform_6, window_bounds = array<i64: 32, 32>}, {pipeline_mode = #tpu.pipeline_mode<synchronous>, transform_indices = @transform_7, window_bounds = array<i64: 1, 32>}, {pipeline_mode = #tpu.pipeline_mode<synchronous>, transform_indices = @transform_8, window_bounds = array<i64: 1, 1, 32>}, {pipeline_mode = #tpu.pipeline_mode<synchronous>, transform_indices = @transform_9, window_bounds = array<i64: 32, 128>}, {pipeline_mode = #tpu.pipeline_mode<synchronous>, transform_indices = @transform_10, window_bounds = array<i64: 32, 128>}, {pipeline_mode = #tpu.pipeline_mode<synchronous>, transform_indices = @transform_11, window_bounds = array<i64: 32, 128>}, {pipeline_mode = #tpu.pipeline_mode<synchronous>, transform_indices = @transform_12, window_bounds = array<i64: 1, 128>}, {transform_indices = @transform_13, window_bounds = array<i64: 2, 32>}, {transform_indices = @transform_14, window_bounds = array<i64: 1, 2, 32>}]} {
    %c0 = arith.constant 0 : index
    %c0_0 = arith.constant 0 : index
    %0 = vector.load %arg1[%c0, %c0_0] : memref<2x32xf32, #tpu.memory_space<vmem>>, vector<2x32xf32>
    %c0_1 = arith.constant 0 : index
    %c0_2 = arith.constant 0 : index
    %c0_3 = arith.constant 0 : index
    %1 = vector.load %arg2[%c0_1, %c0_2, %c0_3] : memref<1x2x32xf32, #tpu.memory_space<vmem>>, vector<1x2x32xf32>
    %2 = vector.shape_cast %1 : vector<1x2x32xf32> to vector<2x32xf32>
    %c0_4 = arith.constant 0 : index
    %c0_5 = arith.constant 0 : index
    %c0_6 = arith.constant 0 : index
    %3 = vector.load %arg3[%c0_4, %c0_5, %c0_6] : memref<2x8x32xf32, #tpu.memory_space<vmem>>, vector<2x8x32xf32>
    %c0_7 = arith.constant 0 : index
    %c0_8 = arith.constant 0 : index
    %4 = vector.load %arg6[%c0_7, %c0_8] : memref<32x32xf32, #tpu.memory_space<vmem>>, vector<32x32xf32>
    %cst = arith.constant dense<0.000000e+00> : vector<2x32xf32>
    %5 = tpu.matmul %0, %4, %cst {dimension_numbers = #tpu.dot_dimension_numbers<[1], [0], [0], [1], [0, 0, 1, 1], [], []>} : vector<2x32xf32>, vector<32x32xf32>, vector<2x32xf32> -> vector<2x32xf32>
    %c0_9 = arith.constant 0 : index
    %c0_10 = arith.constant 0 : index
    %6 = vector.load %arg7[%c0_9, %c0_10] : memref<32x32xf32, #tpu.memory_space<vmem>>, vector<32x32xf32>
    %cst_11 = arith.constant dense<0.000000e+00> : vector<2x32xf32>
    %7 = tpu.matmul %2, %6, %cst_11 {dimension_numbers = #tpu.dot_dimension_numbers<[1], [0], [0], [1], [0, 0, 1, 1], [], []>} : vector<2x32xf32>, vector<32x32xf32>, vector<2x32xf32> -> vector<2x32xf32>
    %8 = arith.addf %5, %7 : vector<2x32xf32>
    %c0_12 = arith.constant 0 : index
    %c0_13 = arith.constant 0 : index
    %9 = vector.load %arg8[%c0_12, %c0_13] : memref<1x32xf32, #tpu.memory_space<vmem>>, vector<1x32xf32>
    %10 = vector.broadcast %9 : vector<1x32xf32> to vector<2x32xf32>
    %11 = arith.addf %8, %10 : vector<2x32xf32>
    %12 = vector.shape_cast %3 : vector<2x8x32xf32> to vector<16x32xf32>
    %c0_14 = arith.constant 0 : index
    %c0_15 = arith.constant 0 : index
    %13 = vector.load %arg5[%c0_14, %c0_15] : memref<32x32xf32, #tpu.memory_space<vmem>>, vector<32x32xf32>
    %cst_16 = arith.constant dense<0.000000e+00> : vector<16x32xf32>
    %14 = tpu.matmul %12, %13, %cst_16 {dimension_numbers = #tpu.dot_dimension_numbers<[1], [0], [0], [1], [0, 0, 1, 1], [], []>} : vector<16x32xf32>, vector<32x32xf32>, vector<16x32xf32> -> vector<16x32xf32>
    %15 = vector.shape_cast %14 : vector<16x32xf32> to vector<2x8x32xf32>
    %16 = vector.shape_cast %11 : vector<2x32xf32> to vector<2x1x32xf32>
    %17 = vector.broadcast %16 : vector<2x1x32xf32> to vector<2x8x32xf32>
    %18 = arith.addf %15, %17 : vector<2x8x32xf32>
    %19 = math.tanh %18 : vector<2x8x32xf32>
    %c0_17 = arith.constant 0 : index
    %c0_18 = arith.constant 0 : index
    %c0_19 = arith.constant 0 : index
    %20 = vector.load %arg9[%c0_17, %c0_18, %c0_19] : memref<1x1x32xf32, #tpu.memory_space<vmem>>, vector<1x1x32xf32>
    %21 = vector.broadcast %20 : vector<1x1x32xf32> to vector<2x8x32xf32>
    %22 = arith.mulf %19, %21 : vector<2x8x32xf32>
    %cst_20 = arith.constant dense<0.000000e+00> : vector<2x8xf32>
    %23 = vector.multi_reduction <add>, %22, %cst_20 [2] : vector<2x8x32xf32> to vector<2x8xf32>
    %24 = vector.shape_cast %23 : vector<2x8xf32> to vector<2x8x1xf32>
    %cst_21 = arith.constant dense<0xFF800000> : vector<2x1xf32>
    %25 = vector.multi_reduction <maximumf>, %24, %cst_21 [1] : vector<2x8x1xf32> to vector<2x1xf32>
    %26 = vector.shape_cast %25 : vector<2x1xf32> to vector<2x1x1xf32>
    %27 = vector.broadcast %26 : vector<2x1x1xf32> to vector<2x8x1xf32>
    %28 = arith.subf %24, %27 : vector<2x8x1xf32>
    %29 = math.exp %28 : vector<2x8x1xf32>
    %cst_22 = arith.constant dense<0.000000e+00> : vector<2x1xf32>
    %30 = vector.multi_reduction <add>, %29, %cst_22 [1] : vector<2x8x1xf32> to vector<2x1xf32>
    %31 = vector.shape_cast %30 : vector<2x1xf32> to vector<2x1x1xf32>
    %32 = vector.broadcast %31 : vector<2x1x1xf32> to vector<2x8x1xf32>
    %33 = arith.divf %29, %32 : vector<2x8x1xf32>
    %34 = vector.broadcast %33 : vector<2x8x1xf32> to vector<2x8x32xf32>
    %35 = arith.mulf %34, %3 : vector<2x8x32xf32>
    %cst_23 = arith.constant dense<0.000000e+00> : vector<2x32xf32>
    %36 = vector.multi_reduction <add>, %35, %cst_23 [1] : vector<2x8x32xf32> to vector<2x32xf32>
    %c0_24 = arith.constant 0 : index
    %c0_25 = arith.constant 0 : index
    %37 = vector.load %arg10[%c0_24, %c0_25] : memref<32x128xf32, #tpu.memory_space<vmem>>, vector<32x128xf32>
    %cst_26 = arith.constant dense<0.000000e+00> : vector<2x128xf32>
    %38 = tpu.matmul %0, %37, %cst_26 {dimension_numbers = #tpu.dot_dimension_numbers<[1], [0], [0], [1], [0, 0, 1, 1], [], []>} : vector<2x32xf32>, vector<32x128xf32>, vector<2x128xf32> -> vector<2x128xf32>
    %c0_27 = arith.constant 0 : index
    %c0_28 = arith.constant 0 : index
    %39 = vector.load %arg11[%c0_27, %c0_28] : memref<32x128xf32, #tpu.memory_space<vmem>>, vector<32x128xf32>
    %cst_29 = arith.constant dense<0.000000e+00> : vector<2x128xf32>
    %40 = tpu.matmul %2, %39, %cst_29 {dimension_numbers = #tpu.dot_dimension_numbers<[1], [0], [0], [1], [0, 0, 1, 1], [], []>} : vector<2x32xf32>, vector<32x128xf32>, vector<2x128xf32> -> vector<2x128xf32>
    %41 = arith.addf %38, %40 : vector<2x128xf32>
    %c0_30 = arith.constant 0 : index
    %c0_31 = arith.constant 0 : index
    %42 = vector.load %arg12[%c0_30, %c0_31] : memref<32x128xf32, #tpu.memory_space<vmem>>, vector<32x128xf32>
    %cst_32 = arith.constant dense<0.000000e+00> : vector<2x128xf32>
    %43 = tpu.matmul %36, %42, %cst_32 {dimension_numbers = #tpu.dot_dimension_numbers<[1], [0], [0], [1], [0, 0, 1, 1], [], []>} : vector<2x32xf32>, vector<32x128xf32>, vector<2x128xf32> -> vector<2x128xf32>
    %44 = arith.addf %41, %43 : vector<2x128xf32>
    %c0_33 = arith.constant 0 : index
    %c0_34 = arith.constant 0 : index
    %45 = vector.load %arg13[%c0_33, %c0_34] : memref<1x128xf32, #tpu.memory_space<vmem>>, vector<1x128xf32>
    %46 = vector.broadcast %45 : vector<1x128xf32> to vector<2x128xf32>
    %47 = arith.addf %44, %46 : vector<2x128xf32>
    %48 = vector.extract_strided_slice %47 {offsets = [0, 0], sizes = [2, 32], strides = [1, 1]} : vector<2x128xf32> to vector<2x32xf32>
    %49 = arith.negf %48 : vector<2x32xf32>
    %50 = math.exp %49 : vector<2x32xf32>
    %cst_35 = arith.constant 1.000000e+00 : f32
    %51 = vector.broadcast %cst_35 : f32 to vector<2x32xf32>
    %52 = arith.addf %51, %50 : vector<2x32xf32>
    %53 = arith.divf %51, %52 : vector<2x32xf32>
    %54 = vector.extract_strided_slice %47 {offsets = [0, 32], sizes = [2, 32], strides = [1, 1]} : vector<2x128xf32> to vector<2x32xf32>
    %55 = arith.negf %54 : vector<2x32xf32>
    %56 = math.exp %55 : vector<2x32xf32>
    %cst_36 = arith.constant 1.000000e+00 : f32
    %57 = vector.broadcast %cst_36 : f32 to vector<2x32xf32>
    %58 = arith.addf %57, %56 : vector<2x32xf32>
    %59 = arith.divf %57, %58 : vector<2x32xf32>
    %60 = vector.extract_strided_slice %47 {offsets = [0, 64], sizes = [2, 32], strides = [1, 1]} : vector<2x128xf32> to vector<2x32xf32>
    %61 = math.tanh %60 : vector<2x32xf32>
    %62 = vector.extract_strided_slice %47 {offsets = [0, 96], sizes = [2, 32], strides = [1, 1]} : vector<2x128xf32> to vector<2x32xf32>
    %63 = arith.negf %62 : vector<2x32xf32>
    %64 = math.exp %63 : vector<2x32xf32>
    %cst_37 = arith.constant 1.000000e+00 : f32
    %65 = vector.broadcast %cst_37 : f32 to vector<2x32xf32>
    %66 = arith.addf %65, %64 : vector<2x32xf32>
    %67 = arith.divf %65, %66 : vector<2x32xf32>
    %c0_38 = arith.constant 0 : index
    %c0_39 = arith.constant 0 : index
    %c0_40 = arith.constant 0 : index
    %68 = vector.load %arg4[%c0_38, %c0_39, %c0_40] : memref<1x2x32xf32, #tpu.memory_space<vmem>>, vector<1x2x32xf32>
    %69 = vector.shape_cast %68 : vector<1x2x32xf32> to vector<2x32xf32>
    %70 = arith.mulf %59, %69 : vector<2x32xf32>
    %71 = arith.mulf %53, %61 : vector<2x32xf32>
    %72 = arith.addf %70, %71 : vector<2x32xf32>
    %73 = math.tanh %72 : vector<2x32xf32>
    %74 = arith.mulf %67, %73 : vector<2x32xf32>
    %c0_41 = arith.constant 0 : index
    %c0_42 = arith.constant 0 : index
    %75 = vector.load %arg14[%c0_41, %c0_42] : memref<2x32xf32, #tpu.memory_space<vmem>>, vector<2x32xf32>
    tpu.vector_store %arg14[%c0_41, %c0_42], %74 {strides = array<i32>} : memref<2x32xf32, #tpu.memory_space<vmem>>, vector<2x32xf32>,
    %c0_43 = arith.constant 0 : index
    %c0_44 = arith.constant 0 : index
    %c0_45 = arith.constant 0 : index
    %76 = vector.load %arg15[%c0_43, %c0_44, %c0_45] : memref<1x2x32xf32, #tpu.memory_space<vmem>>, vector<1x2x32xf32>
    %77 = vector.shape_cast %76 : vector<1x2x32xf32> to vector<2x32xf32>
    %78 = vector.shape_cast %72 : vector<2x32xf32> to vector<1x2x32xf32>
    tpu.vector_store %arg15[%c0_43, %c0_44, %c0_45], %78 {strides = array<i32>} : memref<1x2x32xf32, #tpu.memory_space<vmem>>, vector<1x2x32xf32>,
    return
  }
  func.func @transform_0(%arg0: i32) -> (i32, i32) {
    %c0_i32 = arith.constant 0 : i32
    %c0_i32_0 = arith.constant 0 : i32
    return %arg0, %c0_i32 : i32, i32
  }
  func.func @transform_1(%arg0: i32) -> (i32, i32, i32) {
    %c0_i32 = arith.constant 0 : i32
    %c0_i32_0 = arith.constant 0 : i32
    %c0_i32_1 = arith.constant 0 : i32
    return %c0_i32, %arg0, %c0_i32_0 : i32, i32, i32
  }
  func.func @transform_2(%arg0: i32) -> (i32, i32, i32) {
    %c0_i32 = arith.constant 0 : i32
    %c0_i32_0 = arith.constant 0 : i32
    %c0_i32_1 = arith.constant 0 : i32
    return %arg0, %c0_i32, %c0_i32_0 : i32, i32, i32
  }
  func.func @transform_3(%arg0: i32) -> (i32, i32, i32) {
    %c0_i32 = arith.constant 0 : i32
    %c0_i32_0 = arith.constant 0 : i32
    %c0_i32_1 = arith.constant 0 : i32
    return %c0_i32, %arg0, %c0_i32_0 : i32, i32, i32
  }
  func.func @transform_4(%arg0: i32) -> (i32, i32) {
    %c0_i32 = arith.constant 0 : i32
    %c0_i32_0 = arith.constant 0 : i32
    %c0_i32_1 = arith.constant 0 : i32
    return %c0_i32, %c0_i32_0 : i32, i32
  }
  func.func @transform_5(%arg0: i32) -> (i32, i32) {
    %c0_i32 = arith.constant 0 : i32
    %c0_i32_0 = arith.constant 0 : i32
    %c0_i32_1 = arith.constant 0 : i32
    return %c0_i32, %c0_i32_0 : i32, i32
  }
  func.func @transform_6(%arg0: i32) -> (i32, i32) {
    %c0_i32 = arith.constant 0 : i32
    %c0_i32_0 = arith.constant 0 : i32
    %c0_i32_1 = arith.constant 0 : i32
    return %c0_i32, %c0_i32_0 : i32, i32
  }
  func.func @transform_7(%arg0: i32) -> (i32, i32) {
    %c0_i32 = arith.constant 0 : i32
    %c0_i32_0 = arith.constant 0 : i32
    %c0_i32_1 = arith.constant 0 : i32
    return %c0_i32, %c0_i32_0 : i32, i32
  }
  func.func @transform_8(%arg0: i32) -> (i32, i32, i32) {
    %c0_i32 = arith.constant 0 : i32
    %c0_i32_0 = arith.constant 0 : i32
    %c0_i32_1 = arith.constant 0 : i32
    %c0_i32_2 = arith.constant 0 : i32
    return %c0_i32, %c0_i32_0, %c0_i32_1 : i32, i32, i32
  }
  func.func @transform_9(%arg0: i32) -> (i32, i32) {
    %c0_i32 = arith.constant 0 : i32
    %c0_i32_0 = arith.constant 0 : i32
    %c0_i32_1 = arith.constant 0 : i32
    return %c0_i32, %c0_i32_0 : i32, i32
  }
  func.func @transform_10(%arg0: i32) -> (i32, i32) {
    %c0_i32 = arith.constant 0 : i32
    %c0_i32_0 = arith.constant 0 : i32
    %c0_i32_1 = arith.constant 0 : i32
    return %c0_i32, %c0_i32_0 : i32, i32
  }
  func.func @transform_11(%arg0: i32) -> (i32, i32) {
    %c0_i32 = arith.constant 0 : i32
    %c0_i32_0 = arith.constant 0 : i32
    %c0_i32_1 = arith.constant 0 : i32
    return %c0_i32, %c0_i32_0 : i32, i32
  }
  func.func @transform_12(%arg0: i32) -> (i32, i32) {
    %c0_i32 = arith.constant 0 : i32
    %c0_i32_0 = arith.constant 0 : i32
    %c0_i32_1 = arith.constant 0 : i32
    return %c0_i32, %c0_i32_0 : i32, i32
  }
  func.func @transform_13(%arg0: i32) -> (i32, i32) {
    %c0_i32 = arith.constant 0 : i32
    %c0_i32_0 = arith.constant 0 : i32
    return %arg0, %c0_i32 : i32, i32
  }
  func.func @transform_14(%arg0: i32) -> (i32, i32, i32) {
    %c0_i32 = arith.constant 0 : i32
    %c0_i32_0 = arith.constant 0 : i32
    %c0_i32_1 = arith.constant 0 : i32
    return %c0_i32, %arg0, %c0_i32_0 : i32, i32, i32
  }
}

module attributes {stable_mosaic.version = 11 : i64} {
  func.func @_decoder_reverse_kernel(%arg0: i32, %arg1: memref<2x32xf32, #tpu.memory_space<vmem>>, %arg2: memref<1x2x32xf32, #tpu.memory_space<vmem>>, %arg3: memref<2x8x32xf32, #tpu.memory_space<vmem>>, %arg4: memref<1x2x32xf32, #tpu.memory_space<vmem>>, %arg5: memref<32x32xf32, #tpu.memory_space<vmem>>, %arg6: memref<32x32xf32, #tpu.memory_space<vmem>>, %arg7: memref<32x32xf32, #tpu.memory_space<vmem>>, %arg8: memref<1x32xf32, #tpu.memory_space<vmem>>, %arg9: memref<1x1x32xf32, #tpu.memory_space<vmem>>, %arg10: memref<32x128xf32, #tpu.memory_space<vmem>>, %arg11: memref<32x128xf32, #tpu.memory_space<vmem>>, %arg12: memref<32x128xf32, #tpu.memory_space<vmem>>, %arg13: memref<1x128xf32, #tpu.memory_space<vmem>>, %arg14: memref<2x32xf32, #tpu.memory_space<vmem>>, %arg15: memref<1x2x32xf32, #tpu.memory_space<vmem>>) attributes {dimension_semantics = [#tpu.dimension_semantics<parallel>], iteration_bounds = array<i64: 1>, scalar_prefetch = 0 : i64, scratch_operands = 0 : i64, tpu.core_type = #tpu.core_type<tc>, window_params = [{transform_indices = @transform_0, window_bounds = array<i64: 2, 32>}, {transform_indices = @transform_1, window_bounds = array<i64: 1, 2, 32>}, {transform_indices = @transform_2, window_bounds = array<i64: 2, 8, 32>}, {transform_indices = @transform_3, window_bounds = array<i64: 1, 2, 32>}, {pipeline_mode = #tpu.pipeline_mode<synchronous>, transform_indices = @transform_4, window_bounds = array<i64: 32, 32>}, {pipeline_mode = #tpu.pipeline_mode<synchronous>, transform_indices = @transform_5, window_bounds = array<i64: 32, 32>}, {pipeline_mode = #tpu.pipeline_mode<synchronous>, transform_indices = @transform_6, window_bounds = array<i64: 32, 32>}, {pipeline_mode = #tpu.pipeline_mode<synchronous>, transform_indices = @transform_7, window_bounds = array<i64: 1, 32>}, {pipeline_mode = #tpu.pipeline_mode<synchronous>, transform_indices = @transform_8, window_bounds = array<i64: 1, 1, 32>}, {pipeline_mode = #tpu.pipeline_mode<synchronous>, transform_indices = @transform_9, window_bounds = array<i64: 32, 128>}, {pipeline_mode = #tpu.pipeline_mode<synchronous>, transform_indices = @transform_10, window_bounds = array<i64: 32, 128>}, {pipeline_mode = #tpu.pipeline_mode<synchronous>, transform_indices = @transform_11, window_bounds = array<i64: 32, 128>}, {pipeline_mode = #tpu.pipeline_mode<synchronous>, transform_indices = @transform_12, window_bounds = array<i64: 1, 128>}, {transform_indices = @transform_13, window_bounds = array<i64: 2, 32>}, {transform_indices = @transform_14, window_bounds = array<i64: 1, 2, 32>}]} {
    %c0 = arith.constant 0 : index
    %c0_0 = arith.constant 0 : index
    %0 = vector.load %arg1[%c0, %c0_0] : memref<2x32xf32, #tpu.memory_space<vmem>>, vector<2x32xf32>
    %c0_1 = arith.constant 0 : index
    %c0_2 = arith.constant 0 : index
    %c0_3 = arith.constant 0 : index
    %1 = vector.load %arg2[%c0_1, %c0_2, %c0_3] : memref<1x2x32xf32, #tpu.memory_space<vmem>>, vector<1x2x32xf32>
    %2 = vector.shape_cast %1 : vector<1x2x32xf32> to vector<2x32xf32>
    %c0_4 = arith.constant 0 : index
    %c0_5 = arith.constant 0 : index
    %c0_6 = arith.constant 0 : index
    %3 = vector.load %arg3[%c0_4, %c0_5, %c0_6] : memref<2x8x32xf32, #tpu.memory_space<vmem>>, vector<2x8x32xf32>
    %c0_7 = arith.constant 0 : index
    %c0_8 = arith.constant 0 : index
    %4 = vector.load %arg6[%c0_7, %c0_8] : memref<32x32xf32, #tpu.memory_space<vmem>>, vector<32x32xf32>
    %cst = arith.constant dense<0.000000e+00> : vector<2x32xf32>
    %5 = tpu.matmul %0, %4, %cst {dimension_numbers = #tpu.dot_dimension_numbers<[1], [0], [0], [1], [0, 0, 1, 1], [], []>} : vector<2x32xf32>, vector<32x32xf32>, vector<2x32xf32> -> vector<2x32xf32>
    %c0_9 = arith.constant 0 : index
    %c0_10 = arith.constant 0 : index
    %6 = vector.load %arg7[%c0_9, %c0_10] : memref<32x32xf32, #tpu.memory_space<vmem>>, vector<32x32xf32>
    %cst_11 = arith.constant dense<0.000000e+00> : vector<2x32xf32>
    %7 = tpu.matmul %2, %6, %cst_11 {dimension_numbers = #tpu.dot_dimension_numbers<[1], [0], [0], [1], [0, 0, 1, 1], [], []>} : vector<2x32xf32>, vector<32x32xf32>, vector<2x32xf32> -> vector<2x32xf32>
    %8 = arith.addf %5, %7 : vector<2x32xf32>
    %c0_12 = arith.constant 0 : index
    %c0_13 = arith.constant 0 : index
    %9 = vector.load %arg8[%c0_12, %c0_13] : memref<1x32xf32, #tpu.memory_space<vmem>>, vector<1x32xf32>
    %10 = vector.broadcast %9 : vector<1x32xf32> to vector<2x32xf32>
    %11 = arith.addf %8, %10 : vector<2x32xf32>
    %12 = vector.shape_cast %3 : vector<2x8x32xf32> to vector<16x32xf32>
    %c0_14 = arith.constant 0 : index
    %c0_15 = arith.constant 0 : index
    %13 = vector.load %arg5[%c0_14, %c0_15] : memref<32x32xf32, #tpu.memory_space<vmem>>, vector<32x32xf32>
    %cst_16 = arith.constant dense<0.000000e+00> : vector<16x32xf32>
    %14 = tpu.matmul %12, %13, %cst_16 {dimension_numbers = #tpu.dot_dimension_numbers<[1], [0], [0], [1], [0, 0, 1, 1], [], []>} : vector<16x32xf32>, vector<32x32xf32>, vector<16x32xf32> -> vector<16x32xf32>
    %15 = vector.shape_cast %14 : vector<16x32xf32> to vector<2x8x32xf32>
    %16 = vector.shape_cast %11 : vector<2x32xf32> to vector<2x1x32xf32>
    %17 = vector.broadcast %16 : vector<2x1x32xf32> to vector<2x8x32xf32>
    %18 = arith.addf %15, %17 : vector<2x8x32xf32>
    %19 = math.tanh %18 : vector<2x8x32xf32>
    %c0_17 = arith.constant 0 : index
    %c0_18 = arith.constant 0 : index
    %c0_19 = arith.constant 0 : index
    %20 = vector.load %arg9[%c0_17, %c0_18, %c0_19] : memref<1x1x32xf32, #tpu.memory_space<vmem>>, vector<1x1x32xf32>
    %21 = vector.broadcast %20 : vector<1x1x32xf32> to vector<2x8x32xf32>
    %22 = arith.mulf %19, %21 : vector<2x8x32xf32>
    %cst_20 = arith.constant dense<0.000000e+00> : vector<2x8xf32>
    %23 = vector.multi_reduction <add>, %22, %cst_20 [2] : vector<2x8x32xf32> to vector<2x8xf32>
    %24 = vector.shape_cast %23 : vector<2x8xf32> to vector<2x8x1xf32>
    %cst_21 = arith.constant dense<0xFF800000> : vector<2x1xf32>
    %25 = vector.multi_reduction <maximumf>, %24, %cst_21 [1] : vector<2x8x1xf32> to vector<2x1xf32>
    %26 = vector.shape_cast %25 : vector<2x1xf32> to vector<2x1x1xf32>
    %27 = vector.broadcast %26 : vector<2x1x1xf32> to vector<2x8x1xf32>
    %28 = arith.subf %24, %27 : vector<2x8x1xf32>
    %29 = math.exp %28 : vector<2x8x1xf32>
    %cst_22 = arith.constant dense<0.000000e+00> : vector<2x1xf32>
    %30 = vector.multi_reduction <add>, %29, %cst_22 [1] : vector<2x8x1xf32> to vector<2x1xf32>
    %31 = vector.shape_cast %30 : vector<2x1xf32> to vector<2x1x1xf32>
    %32 = vector.broadcast %31 : vector<2x1x1xf32> to vector<2x8x1xf32>
    %33 = arith.divf %29, %32 : vector<2x8x1xf32>
    %34 = vector.broadcast %33 : vector<2x8x1xf32> to vector<2x8x32xf32>
    %35 = arith.mulf %34, %3 : vector<2x8x32xf32>
    %cst_23 = arith.constant dense<0.000000e+00> : vector<2x32xf32>
    %36 = vector.multi_reduction <add>, %35, %cst_23 [1] : vector<2x8x32xf32> to vector<2x32xf32>
    %c0_24 = arith.constant 0 : index
    %c0_25 = arith.constant 0 : index
    %37 = vector.load %arg10[%c0_24, %c0_25] : memref<32x128xf32, #tpu.memory_space<vmem>>, vector<32x128xf32>
    %cst_26 = arith.constant dense<0.000000e+00> : vector<2x128xf32>
    %38 = tpu.matmul %0, %37, %cst_26 {dimension_numbers = #tpu.dot_dimension_numbers<[1], [0], [0], [1], [0, 0, 1, 1], [], []>} : vector<2x32xf32>, vector<32x128xf32>, vector<2x128xf32> -> vector<2x128xf32>
    %c0_27 = arith.constant 0 : index
    %c0_28 = arith.constant 0 : index
    %39 = vector.load %arg11[%c0_27, %c0_28] : memref<32x128xf32, #tpu.memory_space<vmem>>, vector<32x128xf32>
    %cst_29 = arith.constant dense<0.000000e+00> : vector<2x128xf32>
    %40 = tpu.matmul %2, %39, %cst_29 {dimension_numbers = #tpu.dot_dimension_numbers<[1], [0], [0], [1], [0, 0, 1, 1], [], []>} : vector<2x32xf32>, vector<32x128xf32>, vector<2x128xf32> -> vector<2x128xf32>
    %41 = arith.addf %38, %40 : vector<2x128xf32>
    %c0_30 = arith.constant 0 : index
    %c0_31 = arith.constant 0 : index
    %42 = vector.load %arg12[%c0_30, %c0_31] : memref<32x128xf32, #tpu.memory_space<vmem>>, vector<32x128xf32>
    %cst_32 = arith.constant dense<0.000000e+00> : vector<2x128xf32>
    %43 = tpu.matmul %36, %42, %cst_32 {dimension_numbers = #tpu.dot_dimension_numbers<[1], [0], [0], [1], [0, 0, 1, 1], [], []>} : vector<2x32xf32>, vector<32x128xf32>, vector<2x128xf32> -> vector<2x128xf32>
    %44 = arith.addf %41, %43 : vector<2x128xf32>
    %c0_33 = arith.constant 0 : index
    %c0_34 = arith.constant 0 : index
    %45 = vector.load %arg13[%c0_33, %c0_34] : memref<1x128xf32, #tpu.memory_space<vmem>>, vector<1x128xf32>
    %46 = vector.broadcast %45 : vector<1x128xf32> to vector<2x128xf32>
    %47 = arith.addf %44, %46 : vector<2x128xf32>
    %48 = vector.extract_strided_slice %47 {offsets = [0, 0], sizes = [2, 32], strides = [1, 1]} : vector<2x128xf32> to vector<2x32xf32>
    %49 = arith.negf %48 : vector<2x32xf32>
    %50 = math.exp %49 : vector<2x32xf32>
    %cst_35 = arith.constant 1.000000e+00 : f32
    %51 = vector.broadcast %cst_35 : f32 to vector<2x32xf32>
    %52 = arith.addf %51, %50 : vector<2x32xf32>
    %53 = arith.divf %51, %52 : vector<2x32xf32>
    %54 = vector.extract_strided_slice %47 {offsets = [0, 32], sizes = [2, 32], strides = [1, 1]} : vector<2x128xf32> to vector<2x32xf32>
    %55 = arith.negf %54 : vector<2x32xf32>
    %56 = math.exp %55 : vector<2x32xf32>
    %cst_36 = arith.constant 1.000000e+00 : f32
    %57 = vector.broadcast %cst_36 : f32 to vector<2x32xf32>
    %58 = arith.addf %57, %56 : vector<2x32xf32>
    %59 = arith.divf %57, %58 : vector<2x32xf32>
    %60 = vector.extract_strided_slice %47 {offsets = [0, 64], sizes = [2, 32], strides = [1, 1]} : vector<2x128xf32> to vector<2x32xf32>
    %61 = math.tanh %60 : vector<2x32xf32>
    %62 = vector.extract_strided_slice %47 {offsets = [0, 96], sizes = [2, 32], strides = [1, 1]} : vector<2x128xf32> to vector<2x32xf32>
    %63 = arith.negf %62 : vector<2x32xf32>
    %64 = math.exp %63 : vector<2x32xf32>
    %cst_37 = arith.constant 1.000000e+00 : f32
    %65 = vector.broadcast %cst_37 : f32 to vector<2x32xf32>
    %66 = arith.addf %65, %64 : vector<2x32xf32>
    %67 = arith.divf %65, %66 : vector<2x32xf32>
    %c0_38 = arith.constant 0 : index
    %c0_39 = arith.constant 0 : index
    %c0_40 = arith.constant 0 : index
    %68 = vector.load %arg4[%c0_38, %c0_39, %c0_40] : memref<1x2x32xf32, #tpu.memory_space<vmem>>, vector<1x2x32xf32>
    %69 = vector.shape_cast %68 : vector<1x2x32xf32> to vector<2x32xf32>
    %70 = arith.mulf %59, %69 : vector<2x32xf32>
    %71 = arith.mulf %53, %61 : vector<2x32xf32>
    %72 = arith.addf %70, %71 : vector<2x32xf32>
    %73 = math.tanh %72 : vector<2x32xf32>
    %74 = arith.mulf %67, %73 : vector<2x32xf32>
    %c0_41 = arith.constant 0 : index
    %c0_42 = arith.constant 0 : index
    %75 = vector.load %arg14[%c0_41, %c0_42] : memref<2x32xf32, #tpu.memory_space<vmem>>, vector<2x32xf32>
    tpu.vector_store %arg14[%c0_41, %c0_42], %74 {strides = array<i32>} : memref<2x32xf32, #tpu.memory_space<vmem>>, vector<2x32xf32>,
    %c0_43 = arith.constant 0 : index
    %c0_44 = arith.constant 0 : index
    %c0_45 = arith.constant 0 : index
    %76 = vector.load %arg15[%c0_43, %c0_44, %c0_45] : memref<1x2x32xf32, #tpu.memory_space<vmem>>, vector<1x2x32xf32>
    %77 = vector.shape_cast %76 : vector<1x2x32xf32> to vector<2x32xf32>
    %78 = vector.shape_cast %72 : vector<2x32xf32> to vector<1x2x32xf32>
    tpu.vector_store %arg15[%c0_43, %c0_44, %c0_45], %78 {strides = array<i32>} : memref<1x2x32xf32, #tpu.memory_space<vmem>>, vector<1x2x32xf32>,
    return
  }
  func.func @transform_0(%arg0: i32) -> (i32, i32) {
    %c0_i32 = arith.constant 0 : i32
    %c0_i32_0 = arith.constant 0 : i32
    return %arg0, %c0_i32 : i32, i32
  }
  func.func @transform_1(%arg0: i32) -> (i32, i32, i32) {
    %c0_i32 = arith.constant 0 : i32
    %c0_i32_0 = arith.constant 0 : i32
    %c0_i32_1 = arith.constant 0 : i32
    return %c0_i32, %arg0, %c0_i32_0 : i32, i32, i32
  }
  func.func @transform_2(%arg0: i32) -> (i32, i32, i32) {
    %c0_i32 = arith.constant 0 : i32
    %c0_i32_0 = arith.constant 0 : i32
    %c0_i32_1 = arith.constant 0 : i32
    return %arg0, %c0_i32, %c0_i32_0 : i32, i32, i32
  }
  func.func @transform_3(%arg0: i32) -> (i32, i32, i32) {
    %c0_i32 = arith.constant 0 : i32
    %c0_i32_0 = arith.constant 0 : i32
    %c0_i32_1 = arith.constant 0 : i32
    return %c0_i32, %arg0, %c0_i32_0 : i32, i32, i32
  }
  func.func @transform_4(%arg0: i32) -> (i32, i32) {
    %c0_i32 = arith.constant 0 : i32
    %c0_i32_0 = arith.constant 0 : i32
    %c0_i32_1 = arith.constant 0 : i32
    return %c0_i32, %c0_i32_0 : i32, i32
  }
  func.func @transform_5(%arg0: i32) -> (i32, i32) {
    %c0_i32 = arith.constant 0 : i32
    %c0_i32_0 = arith.constant 0 : i32
    %c0_i32_1 = arith.constant 0 : i32
    return %c0_i32, %c0_i32_0 : i32, i32
  }
  func.func @transform_6(%arg0: i32) -> (i32, i32) {
    %c0_i32 = arith.constant 0 : i32
    %c0_i32_0 = arith.constant 0 : i32
    %c0_i32_1 = arith.constant 0 : i32
    return %c0_i32, %c0_i32_0 : i32, i32
  }
  func.func @transform_7(%arg0: i32) -> (i32, i32) {
    %c0_i32 = arith.constant 0 : i32
    %c0_i32_0 = arith.constant 0 : i32
    %c0_i32_1 = arith.constant 0 : i32
    return %c0_i32, %c0_i32_0 : i32, i32
  }
  func.func @transform_8(%arg0: i32) -> (i32, i32, i32) {
    %c0_i32 = arith.constant 0 : i32
    %c0_i32_0 = arith.constant 0 : i32
    %c0_i32_1 = arith.constant 0 : i32
    %c0_i32_2 = arith.constant 0 : i32
    return %c0_i32, %c0_i32_0, %c0_i32_1 : i32, i32, i32
  }
  func.func @transform_9(%arg0: i32) -> (i32, i32) {
    %c0_i32 = arith.constant 0 : i32
    %c0_i32_0 = arith.constant 0 : i32
    %c0_i32_1 = arith.constant 0 : i32
    return %c0_i32, %c0_i32_0 : i32, i32
  }
  func.func @transform_10(%arg0: i32) -> (i32, i32) {
    %c0_i32 = arith.constant 0 : i32
    %c0_i32_0 = arith.constant 0 : i32
    %c0_i32_1 = arith.constant 0 : i32
    return %c0_i32, %c0_i32_0 : i32, i32
  }
  func.func @transform_11(%arg0: i32) -> (i32, i32) {
    %c0_i32 = arith.constant 0 : i32
    %c0_i32_0 = arith.constant 0 : i32
    %c0_i32_1 = arith.constant 0 : i32
    return %c0_i32, %c0_i32_0 : i32, i32
  }
  func.func @transform_12(%arg0: i32) -> (i32, i32) {
    %c0_i32 = arith.constant 0 : i32
    %c0_i32_0 = arith.constant 0 : i32
    %c0_i32_1 = arith.constant 0 : i32
    return %c0_i32, %c0_i32_0 : i32, i32
  }
  func.func @transform_13(%arg0: i32) -> (i32, i32) {
    %c0_i32 = arith.constant 0 : i32
    %c0_i32_0 = arith.constant 0 : i32
    return %arg0, %c0_i32 : i32, i32
  }
  func.func @transform_14(%arg0: i32) -> (i32, i32, i32) {
    %c0_i32 = arith.constant 0 : i32
    %c0_i32_0 = arith.constant 0 : i32
    %c0_i32_1 = arith.constant 0 : i32
    return %c0_i32, %arg0, %c0_i32_0 : i32, i32, i32
  }
}

</mosaic_0001>

<llo_original>
// kernel: tpu_custom_call.1
$region0: #{tpu_custom_call.1}
  #allocation0 [shape = 'u32[]', space=smem, size = 0x4, offset = 0x4, fixed_abs, tag = 'smem constant byte address 0x4 - core index']
  #allocation1 [shape = 'u32[144,128]{1,0:T(1,128)}', space=vmem, size = 0x12000, scoped, tag = 'internal scratch']
  %s0 = inlined_call_operand.hbm [shape: f32[2,32], index: 0, kind: input, shape index: {}]
  %s1 = inlined_call_operand.hbm [shape: f32[1,2,32], index: 1, kind: input, shape index: {}]
  %s2 = inlined_call_operand.hbm [shape: f32[2,8,32], index: 2, kind: input, shape index: {}]
  %s3 = inlined_call_operand.vmem [shape: f32[1,2,32], index: 3, kind: input, shape index: {}]
  %s4 = inlined_call_operand.hbm [shape: f32[32,32], index: 4, kind: input, shape index: {}]
  %s5 = inlined_call_operand.hbm [shape: f32[32,32], index: 5, kind: input, shape index: {}]
  %s6 = inlined_call_operand.hbm [shape: f32[32,32], index: 6, kind: input, shape index: {}]
  %s7 = inlined_call_operand.vmem [shape: f32[1,32], index: 7, kind: input, shape index: {}]
  %s8 = inlined_call_operand.vmem [shape: f32[1,1,32], index: 8, kind: input, shape index: {}]
  %s9 = inlined_call_operand.hbm [shape: f32[32,128], index: 9, kind: input, shape index: {}]
  %s10 = inlined_call_operand.hbm [shape: f32[32,128], index: 10, kind: input, shape index: {}]
  %s11 = inlined_call_operand.hbm [shape: f32[32,128], index: 11, kind: input, shape index: {}]
  %s12 = inlined_call_operand.vmem [shape: f32[1,128], index: 12, kind: input, shape index: {}]
  %s13 = inlined_call_operand.hbm [shape: f32[2,32], index: 13, kind: output, shape index: {0}]
  %s14 = inlined_call_operand.hbm [shape: f32[1,2,32], index: 14, kind: output, shape index: {1}]
  %15 = xla_tuple %s13, %s14
  %s16 = sld [smem:[#allocation0]]
  $region106: #{tpu_custom_call.1} parent=0
    _
  %s18 = ssub.s32 1, %s16
  %s19 = scalar_select 0, %s18, %s16
  $region1: #{tpu_custom_call.1} parent=0
    #allocation2 [shape = 'u8[1024]{0}', space=vmem, size = 0x400, scoped, tag = 'input window, operand 0, single buffered']
    #allocation3 [shape = 's32[1]{0}', space=sflag, size = 0x4, scoped, tag = 'scoped memory for tpu_custom_call.1']
    #allocation4 [shape = 's32[1]{0}', space=sflag, size = 0x4, scoped, tag = 'scoped memory for tpu_custom_call.1']
    #allocation5 [shape = 'u8[1024]{0}', space=vmem, size = 0x400, scoped, tag = 'input window, operand 1, single buffered']
    #allocation6 [shape = 's32[1]{0}', space=sflag, size = 0x4, scoped, tag = 'scoped memory for tpu_custom_call.1']
    #allocation7 [shape = 'u8[8192]{0}', space=vmem, size = 0x2000, scoped, tag = 'input window, operand 2, single buffered']
    #allocation8 [shape = 'u8[16384]{0}', space=vmem, size = 0x4000, scoped, tag = 'input window, operand 4, single buffered']
    #allocation9 [shape = 's32[1]{0}', space=sflag, size = 0x4, scoped, tag = 'scoped memory for tpu_custom_call.1']
    #allocation10 [shape = 'u8[16384]{0}', space=vmem, size = 0x4000, scoped, tag = 'input window, operand 5, single buffered']
    #allocation11 [shape = 'u8[16384]{0}', space=vmem, size = 0x4000, scoped, tag = 'input window, operand 6, single buffered']
    #allocation12 [shape = 's32[1]{0}', space=sflag, size = 0x4, scoped, tag = 'scoped memory for tpu_custom_call.1']
    #allocation13 [shape = 'u8[16384]{0}', space=vmem, size = 0x4000, scoped, tag = 'input window, operand 9, single buffered']
    #allocation14 [shape = 'u8[16384]{0}', space=vmem, size = 0x4000, scoped, tag = 'input window, operand 10, single buffered']
    #allocation15 [shape = 's32[1]{0}', space=sflag, size = 0x4, scoped, tag = 'scoped memory for tpu_custom_call.1']
    #allocation16 [shape = 'u8[16384]{0}', space=vmem, size = 0x4000, scoped, tag = 'input window, operand 11, single buffered']
    #allocation17 [shape = 'u8[1024]{0}', space=vmem, size = 0x400, scoped, tag = 'output window, operand 0, single buffered']
    #allocation18 [shape = 'u8[1024]{0}', space=vmem, size = 0x400, scoped, tag = 'output window, operand 1, single buffered']
    #allocation19 [shape = 's32[1]{0}', space=sflag, size = 0x4, scoped, tag = 'scoped memory for tpu_custom_call.1']
    %20 = vsyncpa [#allocation3], 0
    %21 = vsyncpa [#allocation6], 0
    %22 = vsyncpa [#allocation9], 0
    %23 = vsyncpa [#allocation12], 0
    %24 = vsyncpa [#allocation15], 0
    %25 = vsyncpa [#allocation4], 0
    %26 = vsyncpa [#allocation19], 0
    // Predicated region
    $region2: #{tpu_custom_call.1} parent=1 // pred_check
      _
    $region3: #{tpu_custom_call.1} parent=1 // pred_check_branch
      %28 = sbr.rel (0) target = $region5
    $region4: #{tpu_custom_call.1} parent=1 // pred_region
      %s30 = ssub.s32 32, 32
      %31 = vsyncadd [#allocation3], %s30
      %s33 = sshll.u32 [#allocation2], 4
      %s34 = int_to_ptr.vmem [resolvable:$true] %s33
      %36 = dma.hbm_to_vmem [thread:$0]  %s0, 32, %s34, [#allocation3]
    $region5: #{tpu_custom_call.1} parent=1 // pred_fallthru
      _
    // Predicated region
    $region6: #{tpu_custom_call.1} parent=1 // pred_check
      _
    $region7: #{tpu_custom_call.1} parent=1 // pred_check_branch
      %38 = sbr.rel (0) target = $region9
    $region8: #{tpu_custom_call.1} parent=1 // pred_region
      %s40 = ssub.s32 32, 32
      %41 = vsyncadd [#allocation6], %s40
      %s43 = sshll.u32 [#allocation5], 4
      %s44 = int_to_ptr.vmem [resolvable:$true] %s43
      %46 = dma.hbm_to_vmem [thread:$0]  %s1, 32, %s44, [#allocation6]
    $region9: #{tpu_custom_call.1} parent=1 // pred_fallthru
      _
    // Predicated region
    $region10: #{tpu_custom_call.1} parent=1 // pred_check
      _
    $region11: #{tpu_custom_call.1} parent=1 // pred_check_branch
      %48 = sbr.rel (0) target = $region13
    $region12: #{tpu_custom_call.1} parent=1 // pred_region
      %s50 = ssub.s32 256, 256
      %51 = vsyncadd [#allocation6], %s50
      %s52 = sshll.u32 [#allocation7], 4
      %s53 = int_to_ptr.vmem [resolvable:$true] %s52
      %58 = dma.hbm_to_vmem [thread:$0]  %s2, 256, %s53, [#allocation6], 128, 128, 8
    $region13: #{tpu_custom_call.1} parent=1 // pred_fallthru
      _
    // Predicated region
    $region14: #{tpu_custom_call.1} parent=1 // pred_check
      _
    $region15: #{tpu_custom_call.1} parent=1 // pred_check_branch
      %60 = sbr.rel (0) target = $region17
    $region16: #{tpu_custom_call.1} parent=1 // pred_region
      _
    $region17: #{tpu_custom_call.1} parent=1 // pred_fallthru
      _
    // Predicated region
    $region18: #{tpu_custom_call.1} parent=1 // pred_check
      _
    $region19: #{tpu_custom_call.1} parent=1 // pred_check_branch
      %62 = sbr.rel (0) target = $region21
    $region20: #{tpu_custom_call.1} parent=1 // pred_region
      %s64 = ssub.s32 512, 512
      %65 = vsyncadd [#allocation9], %s64
      %s66 = sshll.u32 [#allocation8], 4
      %s67 = int_to_ptr.vmem [resolvable:$true] %s66
      %72 = dma.hbm_to_vmem [thread:$0]  %s4, 512, %s67, [#allocation9], 128, 128, 8
    $region21: #{tpu_custom_call.1} parent=1 // pred_fallthru
      _
    // Predicated region
    $region22: #{tpu_custom_call.1} parent=1 // pred_check
      _
    $region23: #{tpu_custom_call.1} parent=1 // pred_check_branch
      %74 = sbr.rel (0) target = $region25
    $region24: #{tpu_custom_call.1} parent=1 // pred_region
      %s76 = ssub.s32 512, 512
      %77 = vsyncadd [#allocation9], %s76
      %s78 = sshll.u32 [#allocation10], 4
      %s79 = int_to_ptr.vmem [resolvable:$true] %s78
      %84 = dma.hbm_to_vmem [thread:$0]  %s5, 512, %s79, [#allocation9], 128, 128, 8
    $region25: #{tpu_custom_call.1} parent=1 // pred_fallthru
      _
    // Predicated region
    $region26: #{tpu_custom_call.1} parent=1 // pred_check
      _
    $region27: #{tpu_custom_call.1} parent=1 // pred_check_branch
      %86 = sbr.rel (0) target = $region29
    $region28: #{tpu_custom_call.1} parent=1 // pred_region
      %s88 = ssub.s32 512, 512
      %89 = vsyncadd [#allocation12], %s88
      %s90 = sshll.u32 [#allocation11], 4
      %s91 = int_to_ptr.vmem [resolvable:$true] %s90
      %96 = dma.hbm_to_vmem [thread:$0]  %s6, 512, %s91, [#allocation12], 128, 128, 8
    $region29: #{tpu_custom_call.1} parent=1 // pred_fallthru
      _
    // Predicated region
    $region30: #{tpu_custom_call.1} parent=1 // pred_check
      _
    $region31: #{tpu_custom_call.1} parent=1 // pred_check_branch
      %98 = sbr.rel (0) target = $region33
    $region32: #{tpu_custom_call.1} parent=1 // pred_region
      _
    $region33: #{tpu_custom_call.1} parent=1 // pred_fallthru
      _
    // Predicated region
    $region34: #{tpu_custom_call.1} parent=1 // pred_check
      _
    $region35: #{tpu_custom_call.1} parent=1 // pred_check_branch
      %100 = sbr.rel (0) target = $region37
    $region36: #{tpu_custom_call.1} parent=1 // pred_region
      _
    $region37: #{tpu_custom_call.1} parent=1 // pred_fallthru
      _
    // Predicated region
    $region38: #{tpu_custom_call.1} parent=1 // pred_check
      _
    $region39: #{tpu_custom_call.1} parent=1 // pred_check_branch
      %102 = sbr.rel (0) target = $region41
    $region40: #{tpu_custom_call.1} parent=1 // pred_region
      %s104 = ssub.s32 512, 512
      %105 = vsyncadd [#allocation12], %s104
      %s106 = sshll.u32 [#allocation13], 4
      %s107 = int_to_ptr.vmem [resolvable:$true] %s106
      %112 = dma.hbm_to_vmem [thread:$0]  %s9, 512, %s107, [#allocation12], 128, 128, 8
    $region41: #{tpu_custom_call.1} parent=1 // pred_fallthru
      _
    // Predicated region
    $region42: #{tpu_custom_call.1} parent=1 // pred_check
      _
    $region43: #{tpu_custom_call.1} parent=1 // pred_check_branch
      %114 = sbr.rel (0) target = $region45
    $region44: #{tpu_custom_call.1} parent=1 // pred_region
      %s116 = ssub.s32 512, 512
      %117 = vsyncadd [#allocation15], %s116
      %s118 = sshll.u32 [#allocation14], 4
      %s119 = int_to_ptr.vmem [resolvable:$true] %s118
      %124 = dma.hbm_to_vmem [thread:$0]  %s10, 512, %s119, [#allocation15], 128, 128, 8
    $region45: #{tpu_custom_call.1} parent=1 // pred_fallthru
      _
    // Predicated region
    $region46: #{tpu_custom_call.1} parent=1 // pred_check
      _
    $region47: #{tpu_custom_call.1} parent=1 // pred_check_branch
      %126 = sbr.rel (0) target = $region49
    $region48: #{tpu_custom_call.1} parent=1 // pred_region
      %s128 = ssub.s32 512, 512
      %129 = vsyncadd [#allocation15], %s128
      %s130 = sshll.u32 [#allocation16], 4
      %s131 = int_to_ptr.vmem [resolvable:$true] %s130
      %136 = dma.hbm_to_vmem [thread:$0]  %s11, 512, %s131, [#allocation15], 128, 128, 8
    $region49: #{tpu_custom_call.1} parent=1 // pred_fallthru
      _
    // Predicated region
    $region50: #{tpu_custom_call.1} parent=1 // pred_check
      _
    $region51: #{tpu_custom_call.1} parent=1 // pred_check_branch
      %138 = sbr.rel (0) target = $region53
    $region52: #{tpu_custom_call.1} parent=1 // pred_region
      _
    $region53: #{tpu_custom_call.1} parent=1 // pred_fallthru
      _
    // Predicated region
    $region54: #{tpu_custom_call.1} parent=1 // pred_check
      _
    $region55: #{tpu_custom_call.1} parent=1 // pred_check_branch
      %140 = sbr.rel (0) target = $region57
    $region56: #{tpu_custom_call.1} parent=1 // pred_region
      %141 = dma.done [#allocation3], 32
    $region57: #{tpu_custom_call.1} parent=1 // pred_fallthru
      _
    // Predicated region
    $region58: #{tpu_custom_call.1} parent=1 // pred_check
      _
    $region59: #{tpu_custom_call.1} parent=1 // pred_check_branch
      %143 = sbr.rel (0) target = $region61
    $region60: #{tpu_custom_call.1} parent=1 // pred_region
      %144 = dma.done [#allocation6], 32
    $region61: #{tpu_custom_call.1} parent=1 // pred_fallthru
      _
    // Predicated region
    $region62: #{tpu_custom_call.1} parent=1 // pred_check
      _
    $region63: #{tpu_custom_call.1} parent=1 // pred_check_branch
      %146 = sbr.rel (0) target = $region65
    $region64: #{tpu_custom_call.1} parent=1 // pred_region
      %147 = dma.done [#allocation6], 256
    $region65: #{tpu_custom_call.1} parent=1 // pred_fallthru
      _
    // Predicated region
    $region66: #{tpu_custom_call.1} parent=1 // pred_check
      _
    $region67: #{tpu_custom_call.1} parent=1 // pred_check_branch
      %149 = sbr.rel (0) target = $region69
    $region68: #{tpu_custom_call.1} parent=1 // pred_region
      %150 = dma.done [#allocation9], 512
    $region69: #{tpu_custom_call.1} parent=1 // pred_fallthru
      _
    // Predicated region
    $region70: #{tpu_custom_call.1} parent=1 // pred_check
      _
    $region71: #{tpu_custom_call.1} parent=1 // pred_check_branch
      %152 = sbr.rel (0) target = $region73
    $region72: #{tpu_custom_call.1} parent=1 // pred_region
      %153 = dma.done [#allocation9], 512
    $region73: #{tpu_custom_call.1} parent=1 // pred_fallthru
      _
    // Predicated region
    $region74: #{tpu_custom_call.1} parent=1 // pred_check
      _
    $region75: #{tpu_custom_call.1} parent=1 // pred_check_branch
      %155 = sbr.rel (0) target = $region77
    $region76: #{tpu_custom_call.1} parent=1 // pred_region
      %156 = dma.done [#allocation12], 512
    $region77: #{tpu_custom_call.1} parent=1 // pred_fallthru
      _
    // Predicated region
    $region78: #{tpu_custom_call.1} parent=1 // pred_check
      _
    $region79: #{tpu_custom_call.1} parent=1 // pred_check_branch
      %158 = sbr.rel (0) target = $region81
    $region80: #{tpu_custom_call.1} parent=1 // pred_region
      %159 = dma.done [#allocation12], 512
    $region81: #{tpu_custom_call.1} parent=1 // pred_fallthru
      _
    // Predicated region
    $region82: #{tpu_custom_call.1} parent=1 // pred_check
      _
    $region83: #{tpu_custom_call.1} parent=1 // pred_check_branch
      %161 = sbr.rel (0) target = $region85
    $region84: #{tpu_custom_call.1} parent=1 // pred_region
      %162 = dma.done [#allocation15], 512
    $region85: #{tpu_custom_call.1} parent=1 // pred_fallthru
      _
    // Predicated region
    $region86: #{tpu_custom_call.1} parent=1 // pred_check
      _
    $region87: #{tpu_custom_call.1} parent=1 // pred_check_branch
      %164 = sbr.rel (0) target = $region89
    $region88: #{tpu_custom_call.1} parent=1 // pred_region
      %165 = dma.done [#allocation15], 512
    $region89: #{tpu_custom_call.1} parent=1 // pred_fallthru
      _
    %v166 = vld [vmem:[#allocation2] sm:$0x3]
    %v167 = vld [vmem:[#allocation5] sm:$0x3]
    %v168 = vld [vmem:[#allocation7] sm:$0xff]
    %v169 = vld [vmem:[#allocation7 + $0x8] sm:$0xff]
    %v170 = vld [vmem:[#allocation10] sm:$0xff]
    %v171 = vld [vmem:[#allocation10 + $0x8] sm:$0xff]
    %v172 = vld [vmem:[#allocation10 + $0x10] sm:$0xff]
    %v173 = vld [vmem:[#allocation10 + $0x18] sm:$0xff]
    %v174 = vld [vmem:[#allocation11] sm:$0xff]
    %v175 = vld [vmem:[#allocation11 + $0x8] sm:$0xff]
    %v176 = vld [vmem:[#allocation11 + $0x10] sm:$0xff]
    %v177 = vld [vmem:[#allocation11 + $0x18] sm:$0xff]
    %vm178 = vcmask 261120
    %v180 = vsel %vm178, %v167, 0
    %182 = vmatprep.subr.mxu0 0.0
    %183 = vmatpush1.msra.mxu0 0.0
    %184 = vmatprep.subr.mxu0 0.0
    %185 = vmatpush1.msra.mxu0 0.0
    %186 = vmatprep.subr.mxu0 0.0
    %187 = vmatpush1.msra.mxu0 0.0
    %188 = vmatprep.subr.mxu0 0.0
    %189 = vmatpush1.msra.mxu0 0.0
    %190 = vmatprep.subr.mxu0 0.0
    %191 = vmatpush1.msra.mxu0 0.0
    %192 = vmatprep.subr.mxu0 0.0
    %193 = vmatpush1.msra.mxu0 0.0
    %194 = vmatprep.subr.mxu0 0.0
    %195 = vmatpush1.msra.mxu0 0.0
    %196 = vmatprep.subr.mxu0 0.0
    %197 = vmatpush1.msra.mxu0 0.0
    %198 = vmatprep.subr.mxu0 0.0
    %199 = vmatpush1.msra.mxu0 0.0
    %200 = vmatprep.subr.mxu0 0.0
    %201 = vmatpush1.msra.mxu0 0.0
    %202 = vmatprep.subr.mxu0 0.0
    %203 = vmatpush1.msra.mxu0 0.0
    %204 = vmatprep.subr.mxu0 0.0
    %205 = vmatpush1.msra.mxu0 0.0
    %206 = vmatprep.subr.mxu0 0.0
    %207 = vmatpush1.msra.mxu0 %v177
    %208 = vmatprep.subr.mxu0 0.0
    %209 = vmatpush1.msra.mxu0 %v176
    %210 = vmatprep.subr.mxu0 0.0
    %211 = vmatpush1.msra.mxu0 %v175
    %212 = vmatprep.subr.mxu0 0.0
    %213 = vmatpush1.msra.mxu0 %v174
    %214 = vmatprep.subr.mxu0 0.0
    %215 = vmatpush2.msra.mxu0 0.0
    %216 = vmatprep.subr.mxu0 0.0
    %217 = vmatpush2.msra.mxu0 0.0
    %218 = vmatprep.subr.mxu0 0.0
    %219 = vmatpush2.msra.mxu0 0.0
    %220 = vmatprep.subr.mxu0 0.0
    %221 = vmatpush2.msra.mxu0 0.0
    %222 = vmatprep.subr.mxu0 0.0
    %223 = vmatpush2.msra.mxu0 0.0
    %224 = vmatprep.subr.mxu0 0.0
    %225 = vmatpush2.msra.mxu0 0.0
    %226 = vmatprep.subr.mxu0 0.0
    %227 = vmatpush2.msra.mxu0 0.0
    %228 = vmatprep.subr.mxu0 0.0
    %229 = vmatpush2.msra.mxu0 0.0
    %230 = vmatprep.subr.mxu0 0.0
    %231 = vmatpush2.msra.mxu0 0.0
    %232 = vmatprep.subr.mxu0 0.0
    %233 = vmatpush2.msra.mxu0 0.0
    %234 = vmatprep.subr.mxu0 0.0
    %235 = vmatpush2.msra.mxu0 0.0
    %236 = vmatprep.subr.mxu0 0.0
    %237 = vmatpush2.msra.mxu0 0.0
    %238 = vmatprep.subr.mxu0 0.0
    %239 = vmatpush2.msra.mxu0 0.0
    %240 = vmatprep.subr.mxu0 0.0
    %241 = vmatpush2.msra.mxu0 0.0
    %242 = vmatprep.subr.mxu0 0.0
    %243 = vmatpush2.msra.mxu0 0.0
    %244 = vmatprep.subr.mxu0 0.0
    %245 = vmatpush2.msra.mxu0 0.0
    %246 = vmatprep.mubr.f32.mxu0 0.0
    %247 = vmatmul.mubr.f32.gmra.mxu0 %v180
    %v248 = vpop.f32.mrf.mxu0
    %v249 = vadd.f32 0.0, %v248
    %v250 = vpop.f32.mrf.mxu0
    %251 = vdwg.mxu0
    %v253 = vsel %vm178, %v166, 0
    %255 = vmatprep.subr.mxu0 0.0
    %256 = vmatpush1.msra.mxu0 0.0
    %257 = vmatprep.subr.mxu0 0.0
    %258 = vmatpush1.msra.mxu0 0.0
    %259 = vmatprep.subr.mxu0 0.0
    %260 = vmatpush1.msra.mxu0 0.0
    %261 = vmatprep.subr.mxu0 0.0
    %262 = vmatpush1.msra.mxu0 0.0
    %263 = vmatprep.subr.mxu0 0.0
    %264 = vmatpush1.msra.mxu0 0.0
    %265 = vmatprep.subr.mxu0 0.0
    %266 = vmatpush1.msra.mxu0 0.0
    %267 = vmatprep.subr.mxu0 0.0
    %268 = vmatpush1.msra.mxu0 0.0
    %269 = vmatprep.subr.mxu0 0.0
    %270 = vmatpush1.msra.mxu0 0.0
    %271 = vmatprep.subr.mxu0 0.0
    %272 = vmatpush1.msra.mxu0 0.0
    %273 = vmatprep.subr.mxu0 0.0
    %274 = vmatpush1.msra.mxu0 0.0
    %275 = vmatprep.subr.mxu0 0.0
    %276 = vmatpush1.msra.mxu0 0.0
    %277 = vmatprep.subr.mxu0 0.0
    %278 = vmatpush1.msra.mxu0 0.0
    %279 = vmatprep.subr.mxu0 0.0
    %280 = vmatpush1.msra.mxu0 %v173
    %281 = vmatprep.subr.mxu0 0.0
    %282 = vmatpush1.msra.mxu0 %v172
    %283 = vmatprep.subr.mxu0 0.0
    %284 = vmatpush1.msra.mxu0 %v171
    %285 = vmatprep.subr.mxu0 0.0
    %286 = vmatpush1.msra.mxu0 %v170
    %287 = vmatprep.subr.mxu0 0.0
    %288 = vmatpush2.msra.mxu0 0.0
    %289 = vmatprep.subr.mxu0 0.0
    %290 = vmatpush2.msra.mxu0 0.0
    %291 = vmatprep.subr.mxu0 0.0
    %292 = vmatpush2.msra.mxu0 0.0
    %293 = vmatprep.subr.mxu0 0.0
    %294 = vmatpush2.msra.mxu0 0.0
    %295 = vmatprep.subr.mxu0 0.0
    %296 = vmatpush2.msra.mxu0 0.0
    %297 = vmatprep.subr.mxu0 0.0
    %298 = vmatpush2.msra.mxu0 0.0
    %299 = vmatprep.subr.mxu0 0.0
    %300 = vmatpush2.msra.mxu0 0.0
    %301 = vmatprep.subr.mxu0 0.0
    %302 = vmatpush2.msra.mxu0 0.0
    %303 = vmatprep.subr.mxu0 0.0
    %304 = vmatpush2.msra.mxu0 0.0
    %305 = vmatprep.subr.mxu0 0.0
    %306 = vmatpush2.msra.mxu0 0.0
    %307 = vmatprep.subr.mxu0 0.0
    %308 = vmatpush2.msra.mxu0 0.0
    %309 = vmatprep.subr.mxu0 0.0
    %310 = vmatpush2.msra.mxu0 0.0
    %311 = vmatprep.subr.mxu0 0.0
    %312 = vmatpush2.msra.mxu0 0.0
    %313 = vmatprep.subr.mxu0 0.0
    %314 = vmatpush2.msra.mxu0 0.0
    %315 = vmatprep.subr.mxu0 0.0
    %316 = vmatpush2.msra.mxu0 0.0
    %317 = vmatprep.subr.mxu0 0.0
    %318 = vmatpush2.msra.mxu0 0.0
    %319 = vmatprep.mubr.f32.mxu0 0.0
    %320 = vmatmul.mubr.f32.gmra.mxu0 %v253
    %v321 = vpop.f32.mrf.mxu0
    %v322 = vadd.f32 %v249, %v321
    %v323 = vpop.f32.mrf.mxu0
    %324 = vdwg.mxu0
    %v325 = vld [vmem:[%s7] sm:$0x1]
    %v327 = vlaneseq
    %v328 = vshrl.u32 %v327, 7
    %v329 = vsub.s32 0, %v328
    %v330 = vrot.slane %v325, %v329
    %v332 = vadd.f32 %v322, %v330
    %v333 = vld [vmem:[#allocation8] sm:$0xff]
    %v334 = vld [vmem:[#allocation8 + $0x8] sm:$0xff]
    %v335 = vld [vmem:[#allocation8 + $0x10] sm:$0xff]
    %v336 = vld [vmem:[#allocation8 + $0x18] sm:$0xff]
    %v338 = vsel %vm178, %v168, 0
    %v341 = vsel %vm178, %v169, 0
    %343 = vmatprep.subr.mxu0 0.0
    %344 = vmatpush1.msra.mxu0 0.0
    %345 = vmatprep.subr.mxu0 0.0
    %346 = vmatpush1.msra.mxu0 0.0
    %347 = vmatprep.subr.mxu0 0.0
    %348 = vmatpush1.msra.mxu0 0.0
    %349 = vmatprep.subr.mxu0 0.0
    %350 = vmatpush1.msra.mxu0 0.0
    %351 = vmatprep.subr.mxu0 0.0
    %352 = vmatpush1.msra.mxu0 0.0
    %353 = vmatprep.subr.mxu0 0.0
    %354 = vmatpush1.msra.mxu0 0.0
    %355 = vmatprep.subr.mxu0 0.0
    %356 = vmatpush1.msra.mxu0 0.0
    %357 = vmatprep.subr.mxu0 0.0
    %358 = vmatpush1.msra.mxu0 0.0
    %359 = vmatprep.subr.mxu0 0.0
    %360 = vmatpush1.msra.mxu0 0.0
    %361 = vmatprep.subr.mxu0 0.0
    %362 = vmatpush1.msra.mxu0 0.0
    %363 = vmatprep.subr.mxu0 0.0
    %364 = vmatpush1.msra.mxu0 0.0
    %365 = vmatprep.subr.mxu0 0.0
    %366 = vmatpush1.msra.mxu0 0.0
    %367 = vmatprep.subr.mxu0 0.0
    %368 = vmatpush1.msra.mxu0 %v336
    %369 = vmatprep.subr.mxu0 0.0
    %370 = vmatpush1.msra.mxu0 %v335
    %371 = vmatprep.subr.mxu0 0.0
    %372 = vmatpush1.msra.mxu0 %v334
    %373 = vmatprep.subr.mxu0 0.0
    %374 = vmatpush1.msra.mxu0 %v333
    %375 = vmatprep.subr.mxu0 0.0
    %376 = vmatpush2.msra.mxu0 0.0
    %377 = vmatprep.subr.mxu0 0.0
    %378 = vmatpush2.msra.mxu0 0.0
    %379 = vmatprep.subr.mxu0 0.0
    %380 = vmatpush2.msra.mxu0 0.0
    %381 = vmatprep.subr.mxu0 0.0
    %382 = vmatpush2.msra.mxu0 0.0
    %383 = vmatprep.subr.mxu0 0.0
    %384 = vmatpush2.msra.mxu0 0.0
    %385 = vmatprep.subr.mxu0 0.0
    %386 = vmatpush2.msra.mxu0 0.0
    %387 = vmatprep.subr.mxu0 0.0
    %388 = vmatpush2.msra.mxu0 0.0
    %389 = vmatprep.subr.mxu0 0.0
    %390 = vmatpush2.msra.mxu0 0.0
    %391 = vmatprep.subr.mxu0 0.0
    %392 = vmatpush2.msra.mxu0 0.0
    %393 = vmatprep.subr.mxu0 0.0
    %394 = vmatpush2.msra.mxu0 0.0
    %395 = vmatprep.subr.mxu0 0.0
    %396 = vmatpush2.msra.mxu0 0.0
    %397 = vmatprep.subr.mxu0 0.0
    %398 = vmatpush2.msra.mxu0 0.0
    %399 = vmatprep.subr.mxu0 0.0
    %400 = vmatpush2.msra.mxu0 0.0
    %401 = vmatprep.subr.mxu0 0.0
    %402 = vmatpush2.msra.mxu0 0.0
    %403 = vmatprep.subr.mxu0 0.0
    %404 = vmatpush2.msra.mxu0 0.0
    %405 = vmatprep.subr.mxu0 0.0
    %406 = vmatpush2.msra.mxu0 0.0
    %407 = vmatprep.mubr.f32.mxu0 0.0
    %408 = vmatmul.mubr.f32.gmra.mxu0 %v338
    %v409 = vpop.f32.mrf.mxu0
    %v410 = vadd.f32 0.0, %v409
    %v411 = vpop.f32.mrf.mxu0
    %412 = vmatprep.mubr.f32.mxu0 0.0
    %413 = vmatmul.mubr.f32.gmra.mxu0 %v341
    %v414 = vpop.f32.mrf.mxu0
    %v415 = vadd.f32 0.0, %v414
    %v416 = vpop.f32.mrf.mxu0
    %417 = vdwg.mxu0
    %v420 = vunpack.c.l.s4 1966171168
    %v421 = vunpack.c.0.s8 %v420
    %v422 = vlaneseq
    %v423 = vshrl.u32 %v422, 7
    %v424 = vsub.s32 %v421, %v423
    %v425 = vrot.slane %v332, %v424
    %v426 = vcombine.high %v425, %v425
    %v428 = vunpack.c.l.s4 1966171168
    %v429 = vunpack.c.0.s8 %v428
    %v430 = vlaneseq
    %v431 = vshrl.u32 %v430, 7
    %v432 = vsub.s32 %v429, %v431
    %v433 = vrot.slane %v425, %v432
    %v435 = vunpack.c.l.s4 1966171168
    %v436 = vunpack.c.0.s8 %v435
    %v437 = vlaneseq
    %v438 = vshrl.u32 %v437, 7
    %v439 = vsub.s32 %v436, %v438
    %v440 = vrot.slane %v426, %v439
    %v441 = vlaneseq
    %v442 = vshrl.u32 %v441, 7
    %v443 = vsub.s32 0, %v442
    %v444 = vrot.slane %v433, %v443
    %v445 = vlaneseq
    %v446 = vshrl.u32 %v445, 7
    %v447 = vsub.s32 0, %v446
    %v448 = vrot.slane %v440, %v447
    %v451 = vadd.f32 %v410, %v444
    %v452 = vadd.f32 %v415, %v448
    %v453 = vtanh.pop %v451
    %v454 = vtanh.pop %v452
    %v455 = vld [vmem:[%s8] sm:$0x1]
    %v457 = vlaneseq
    %v458 = vshrl.u32 %v457, 7
    %v459 = vsub.s32 0, %v458
    %v460 = vrot.slane %v455, %v459
    %v462 = vmul.f32 %v453, %v460
    %v463 = vmul.f32 %v454, %v460
    %v464 = vsel %vm178, %v462, 0.0
    %465 = vadd.xlane.f32.xlu0 %v464
    %v466 = vpop.xlane.xlu0 %465
    %v467 = vsel %vm178, %v463, 0.0
    %468 = vadd.xlane.f32.xlu0 %v467
    %v469 = vpop.xlane.xlu0 %468
    %v470 = vrot.slane %v466, 4
    %v471 = vmax.f32 %v466, %v470
    %v472 = vrot.slane %v471, 2
    %v473 = vmax.f32 %v471, %v472
    %v474 = vrot.slane %v473, 1
    %v475 = vmax.f32 %v473, %v474
    %v476 = vrot.slane %v469, 4
    %v477 = vmax.f32 %v469, %v476
    %v478 = vrot.slane %v477, 2
    %v479 = vmax.f32 %v477, %v478
    %v480 = vrot.slane %v479, 1
    %v481 = vmax.f32 %v479, %v480
    %v482 = vsub.f32 %v466, %v475
    %v483 = vsub.f32 %v469, %v481
    %v484 = vmul.f32 %v482, 1.442695
    %v485 = vpow.pop %v484
    %v486 = vmul.f32 %v483, 1.442695
    %v487 = vpow.pop %v486
    %v488 = vrot.slane %v485, 4
    %v489 = vadd.f32 %v485, %v488
    %v490 = vrot.slane %v489, 2
    %v491 = vadd.f32 %v489, %v490
    %v492 = vrot.slane %v491, 1
    %v493 = vadd.f32 %v491, %v492
    %v494 = vrot.slane %v487, 4
    %v495 = vadd.f32 %v487, %v494
    %v496 = vrot.slane %v495, 2
    %v497 = vadd.f32 %v495, %v496
    %v498 = vrot.slane %v497, 1
    %v499 = vadd.f32 %v497, %v498
    %v500 = vrcp.pop %v493
    %v501 = vmul.f32 %v485, %v500
    %v502 = vrcp.pop %v499
    %v503 = vmul.f32 %v487, %v502
    %v504 = vmul.f32 %v501, %v168
    %v505 = vmul.f32 %v503, %v169
    %v506 = vsel %vm178, %v504, 0.0
    %v507 = vrot.slane %v506, 4
    %v508 = vadd.f32 %v506, %v507
    %v509 = vrot.slane %v508, 2
    %v510 = vadd.f32 %v508, %v509
    %v511 = vrot.slane %v510, 1
    %v512 = vadd.f32 %v510, %v511
    %v513 = vsel %vm178, %v505, 0.0
    %v514 = vrot.slane %v513, 4
    %v515 = vadd.f32 %v513, %v514
    %v516 = vrot.slane %v515, 2
    %v517 = vadd.f32 %v515, %v516
    %v518 = vrot.slane %v517, 1
    %v519 = vadd.f32 %v517, %v518
    %v520 = vld [vmem:[#allocation13] sm:$0xff]
    %v521 = vld [vmem:[#allocation13 + $0x8] sm:$0xff]
    %v522 = vld [vmem:[#allocation13 + $0x10] sm:$0xff]
    %v523 = vld [vmem:[#allocation13 + $0x18] sm:$0xff]
    %v524 = vld [vmem:[#allocation14] sm:$0xff]
    %v525 = vld [vmem:[#allocation14 + $0x8] sm:$0xff]
    %v526 = vld [vmem:[#allocation14 + $0x10] sm:$0xff]
    %v527 = vld [vmem:[#allocation14 + $0x18] sm:$0xff]
    %528 = vmatprep.subr.mxu0 0.0
    %529 = vmatpush1.msra.mxu0 0.0
    %530 = vmatprep.subr.mxu0 0.0
    %531 = vmatpush1.msra.mxu0 0.0
    %532 = vmatprep.subr.mxu0 0.0
    %533 = vmatpush1.msra.mxu0 0.0
    %534 = vmatprep.subr.mxu0 0.0
    %535 = vmatpush1.msra.mxu0 0.0
    %536 = vmatprep.subr.mxu0 0.0
    %537 = vmatpush1.msra.mxu0 0.0
    %538 = vmatprep.subr.mxu0 0.0
    %539 = vmatpush1.msra.mxu0 0.0
    %540 = vmatprep.subr.mxu0 0.0
    %541 = vmatpush1.msra.mxu0 0.0
    %542 = vmatprep.subr.mxu0 0.0
    %543 = vmatpush1.msra.mxu0 0.0
    %544 = vmatprep.subr.mxu0 0.0
    %545 = vmatpush1.msra.mxu0 0.0
    %546 = vmatprep.subr.mxu0 0.0
    %547 = vmatpush1.msra.mxu0 0.0
    %548 = vmatprep.subr.mxu0 0.0
    %549 = vmatpush1.msra.mxu0 0.0
    %550 = vmatprep.subr.mxu0 0.0
    %551 = vmatpush1.msra.mxu0 0.0
    %552 = vmatprep.subr.mxu0 0.0
    %553 = vmatpush1.msra.mxu0 %v527
    %554 = vmatprep.subr.mxu0 0.0
    %555 = vmatpush1.msra.mxu0 %v526
    %556 = vmatprep.subr.mxu0 0.0
    %557 = vmatpush1.msra.mxu0 %v525
    %558 = vmatprep.subr.mxu0 0.0
    %559 = vmatpush1.msra.mxu0 %v524
    %560 = vmatprep.subr.mxu0 0.0
    %561 = vmatpush2.msra.mxu0 0.0
    %562 = vmatprep.subr.mxu0 0.0
    %563 = vmatpush2.msra.mxu0 0.0
    %564 = vmatprep.subr.mxu0 0.0
    %565 = vmatpush2.msra.mxu0 0.0
    %566 = vmatprep.subr.mxu0 0.0
    %567 = vmatpush2.msra.mxu0 0.0
    %568 = vmatprep.subr.mxu0 0.0
    %569 = vmatpush2.msra.mxu0 0.0
    %570 = vmatprep.subr.mxu0 0.0
    %571 = vmatpush2.msra.mxu0 0.0
    %572 = vmatprep.subr.mxu0 0.0
    %573 = vmatpush2.msra.mxu0 0.0
    %574 = vmatprep.subr.mxu0 0.0
    %575 = vmatpush2.msra.mxu0 0.0
    %576 = vmatprep.subr.mxu0 0.0
    %577 = vmatpush2.msra.mxu0 0.0
    %578 = vmatprep.subr.mxu0 0.0
    %579 = vmatpush2.msra.mxu0 0.0
    %580 = vmatprep.subr.mxu0 0.0
    %581 = vmatpush2.msra.mxu0 0.0
    %582 = vmatprep.subr.mxu0 0.0
    %583 = vmatpush2.msra.mxu0 0.0
    %584 = vmatprep.subr.mxu0 0.0
    %585 = vmatpush2.msra.mxu0 0.0
    %586 = vmatprep.subr.mxu0 0.0
    %587 = vmatpush2.msra.mxu0 0.0
    %588 = vmatprep.subr.mxu0 0.0
    %589 = vmatpush2.msra.mxu0 0.0
    %590 = vmatprep.subr.mxu0 0.0
    %591 = vmatpush2.msra.mxu0 0.0
    %592 = vmatprep.mubr.f32.mxu0 0.0
    %593 = vmatmul.mubr.f32.gmra.mxu0 %v180
    %v594 = vpop.f32.mrf.mxu0
    %v595 = vadd.f32 0.0, %v594
    %v596 = vpop.f32.mrf.mxu0
    %597 = vdwg.mxu0
    %598 = vmatprep.subr.mxu0 0.0
    %599 = vmatpush1.msra.mxu0 0.0
    %600 = vmatprep.subr.mxu0 0.0
    %601 = vmatpush1.msra.mxu0 0.0
    %602 = vmatprep.subr.mxu0 0.0
    %603 = vmatpush1.msra.mxu0 0.0
    %604 = vmatprep.subr.mxu0 0.0
    %605 = vmatpush1.msra.mxu0 0.0
    %606 = vmatprep.subr.mxu0 0.0
    %607 = vmatpush1.msra.mxu0 0.0
    %608 = vmatprep.subr.mxu0 0.0
    %609 = vmatpush1.msra.mxu0 0.0
    %610 = vmatprep.subr.mxu0 0.0
    %611 = vmatpush1.msra.mxu0 0.0
    %612 = vmatprep.subr.mxu0 0.0
    %613 = vmatpush1.msra.mxu0 0.0
    %614 = vmatprep.subr.mxu0 0.0
    %615 = vmatpush1.msra.mxu0 0.0
    %616 = vmatprep.subr.mxu0 0.0
    %617 = vmatpush1.msra.mxu0 0.0
    %618 = vmatprep.subr.mxu0 0.0
    %619 = vmatpush1.msra.mxu0 0.0
    %620 = vmatprep.subr.mxu0 0.0
    %621 = vmatpush1.msra.mxu0 0.0
    %622 = vmatprep.subr.mxu0 0.0
    %623 = vmatpush1.msra.mxu0 %v523
    %624 = vmatprep.subr.mxu0 0.0
    %625 = vmatpush1.msra.mxu0 %v522
    %626 = vmatprep.subr.mxu0 0.0
    %627 = vmatpush1.msra.mxu0 %v521
    %628 = vmatprep.subr.mxu0 0.0
    %629 = vmatpush1.msra.mxu0 %v520
    %630 = vmatprep.subr.mxu0 0.0
    %631 = vmatpush2.msra.mxu0 0.0
    %632 = vmatprep.subr.mxu0 0.0
    %633 = vmatpush2.msra.mxu0 0.0
    %634 = vmatprep.subr.mxu0 0.0
    %635 = vmatpush2.msra.mxu0 0.0
    %636 = vmatprep.subr.mxu0 0.0
    %637 = vmatpush2.msra.mxu0 0.0
    %638 = vmatprep.subr.mxu0 0.0
    %639 = vmatpush2.msra.mxu0 0.0
    %640 = vmatprep.subr.mxu0 0.0
    %641 = vmatpush2.msra.mxu0 0.0
    %642 = vmatprep.subr.mxu0 0.0
    %643 = vmatpush2.msra.mxu0 0.0
    %644 = vmatprep.subr.mxu0 0.0
    %645 = vmatpush2.msra.mxu0 0.0
    %646 = vmatprep.subr.mxu0 0.0
    %647 = vmatpush2.msra.mxu0 0.0
    %648 = vmatprep.subr.mxu0 0.0
    %649 = vmatpush2.msra.mxu0 0.0
    %650 = vmatprep.subr.mxu0 0.0
    %651 = vmatpush2.msra.mxu0 0.0
    %652 = vmatprep.subr.mxu0 0.0
    %653 = vmatpush2.msra.mxu0 0.0
    %654 = vmatprep.subr.mxu0 0.0
    %655 = vmatpush2.msra.mxu0 0.0
    %656 = vmatprep.subr.mxu0 0.0
    %657 = vmatpush2.msra.mxu0 0.0
    %658 = vmatprep.subr.mxu0 0.0
    %659 = vmatpush2.msra.mxu0 0.0
    %660 = vmatprep.subr.mxu0 0.0
    %661 = vmatpush2.msra.mxu0 0.0
    %662 = vmatprep.mubr.f32.mxu0 0.0
    %663 = vmatmul.mubr.f32.gmra.mxu0 %v253
    %v664 = vpop.f32.mrf.mxu0
    %v665 = vadd.f32 %v595, %v664
    %v666 = vpop.f32.mrf.mxu0
    %667 = vdwg.mxu0
    %v668 = vld [vmem:[#allocation16] sm:$0xff]
    %v669 = vld [vmem:[#allocation16 + $0x8] sm:$0xff]
    %v670 = vld [vmem:[#allocation16 + $0x10] sm:$0xff]
    %v671 = vld [vmem:[#allocation16 + $0x18] sm:$0xff]
    %vm674 = vcmask 1041409
    %v675 = vsel %vm674, %v519, %v512
    %v676 = vsel %vm178, %v675, 0
    %678 = vmatprep.subr.mxu0 0.0
    %679 = vmatpush1.msra.mxu0 0.0
    %680 = vmatprep.subr.mxu0 0.0
    %681 = vmatpush1.msra.mxu0 0.0
    %682 = vmatprep.subr.mxu0 0.0
    %683 = vmatpush1.msra.mxu0 0.0
    %684 = vmatprep.subr.mxu0 0.0
    %685 = vmatpush1.msra.mxu0 0.0
    %686 = vmatprep.subr.mxu0 0.0
    %687 = vmatpush1.msra.mxu0 0.0
    %688 = vmatprep.subr.mxu0 0.0
    %689 = vmatpush1.msra.mxu0 0.0
    %690 = vmatprep.subr.mxu0 0.0
    %691 = vmatpush1.msra.mxu0 0.0
    %692 = vmatprep.subr.mxu0 0.0
    %693 = vmatpush1.msra.mxu0 0.0
    %694 = vmatprep.subr.mxu0 0.0
    %695 = vmatpush1.msra.mxu0 0.0
    %696 = vmatprep.subr.mxu0 0.0
    %697 = vmatpush1.msra.mxu0 0.0
    %698 = vmatprep.subr.mxu0 0.0
    %699 = vmatpush1.msra.mxu0 0.0
    %700 = vmatprep.subr.mxu0 0.0
    %701 = vmatpush1.msra.mxu0 0.0
    %702 = vmatprep.subr.mxu0 0.0
    %703 = vmatpush1.msra.mxu0 %v671
    %704 = vmatprep.subr.mxu0 0.0
    %705 = vmatpush1.msra.mxu0 %v670
    %706 = vmatprep.subr.mxu0 0.0
    %707 = vmatpush1.msra.mxu0 %v669
    %708 = vmatprep.subr.mxu0 0.0
    %709 = vmatpush1.msra.mxu0 %v668
    %710 = vmatprep.subr.mxu0 0.0
    %711 = vmatpush2.msra.mxu0 0.0
    %712 = vmatprep.subr.mxu0 0.0
    %713 = vmatpush2.msra.mxu0 0.0
    %714 = vmatprep.subr.mxu0 0.0
    %715 = vmatpush2.msra.mxu0 0.0
    %716 = vmatprep.subr.mxu0 0.0
    %717 = vmatpush2.msra.mxu0 0.0
    %718 = vmatprep.subr.mxu0 0.0
    %719 = vmatpush2.msra.mxu0 0.0
    %720 = vmatprep.subr.mxu0 0.0
    %721 = vmatpush2.msra.mxu0 0.0
    %722 = vmatprep.subr.mxu0 0.0
    %723 = vmatpush2.msra.mxu0 0.0
    %724 = vmatprep.subr.mxu0 0.0
    %725 = vmatpush2.msra.mxu0 0.0
    %726 = vmatprep.subr.mxu0 0.0
    %727 = vmatpush2.msra.mxu0 0.0
    %728 = vmatprep.subr.mxu0 0.0
    %729 = vmatpush2.msra.mxu0 0.0
    %730 = vmatprep.subr.mxu0 0.0
    %731 = vmatpush2.msra.mxu0 0.0
    %732 = vmatprep.subr.mxu0 0.0
    %733 = vmatpush2.msra.mxu0 0.0
    %734 = vmatprep.subr.mxu0 0.0
    %735 = vmatpush2.msra.mxu0 0.0
    %736 = vmatprep.subr.mxu0 0.0
    %737 = vmatpush2.msra.mxu0 0.0
    %738 = vmatprep.subr.mxu0 0.0
    %739 = vmatpush2.msra.mxu0 0.0
    %740 = vmatprep.subr.mxu0 0.0
    %741 = vmatpush2.msra.mxu0 0.0
    %742 = vmatprep.mubr.f32.mxu0 0.0
    %743 = vmatmul.mubr.f32.gmra.mxu0 %v676
    %v744 = vpop.f32.mrf.mxu0
    %v745 = vadd.f32 0.0, %v744
    %v746 = vpop.f32.mrf.mxu0
    %747 = vdwg.mxu0
    %v748 = vadd.f32 %v665, %v745
    %v749 = vld [vmem:[%s12] sm:$0x1]
    %v751 = vlaneseq
    %v752 = vshrl.u32 %v751, 7
    %v753 = vsub.s32 0, %v752
    %v754 = vrot.slane %v749, %v753
    %v756 = vadd.f32 %v748, %v754
    %v757 = vxor.u32 %v756, 2147483648
    %v758 = vmul.f32 %v757, 1.442695
    %v759 = vpow.pop %v758
    %v760 = vadd.f32 %v759, 1.0
    %v761 = vrcp.pop %v760
    %v762 = vmul.f32 1.0, %v761
    %v763 = vtanh.pop %v756
    %v764 = vld [vmem:[%s3] sm:$0x3]
    %766 = vrot.lane.b32.xlu0 %v764, 32
    %v767 = vpop.permute.xlu0 %766
    %v769 = vmul.f32 %v762, %v767
    %771 = vrot.lane.b32.xlu0 %v763, 64
    %v772 = vpop.permute.xlu0 %771
    %v774 = vmul.f32 %v762, %v772
    %776 = vrot.lane.b32.xlu0 %v774, 32
    %v777 = vpop.permute.xlu0 %776
    %v779 = vadd.f32 %v769, %v777
    %v780 = vtanh.pop %v779
    %782 = vrot.lane.b32.xlu0 %v780, 64
    %v783 = vpop.permute.xlu0 %782
    %v785 = vmul.f32 %v762, %v783
    %787 = vrot.lane.b32.xlu0 %v785, 32
    %v788 = vpop.permute.xlu0 %787
    %vm790 = vcmask 254976
    %791 = vst.msk [vmem:[#allocation17] sm:$0x3] %vm790, %v788
    %793 = vrot.lane.b32.xlu0 %v779, 96
    %v794 = vpop.permute.xlu0 %793
    %796 = vst.msk [vmem:[#allocation18] sm:$0x3] %vm790, %v794
    // Predicated region
    $region90: #{tpu_custom_call.1} parent=1 // pred_check
      _
    $region91: #{tpu_custom_call.1} parent=1 // pred_check_branch
      %798 = sbr.rel (0) target = $region93
    $region92: #{tpu_custom_call.1} parent=1 // pred_region
      %s800 = ssub.s32 32, 32
      %801 = vsyncadd [#allocation4], %s800
      %s803 = sshll.u32 [#allocation17], 4
      %s804 = int_to_ptr.vmem [resolvable:$true] %s803
      %806 = dma.vmem_to_hbm [thread:$0]  %s804, 32, %s13, [#allocation4]
    $region93: #{tpu_custom_call.1} parent=1 // pred_fallthru
      _
    // Predicated region
    $region94: #{tpu_custom_call.1} parent=1 // pred_check
      _
    $region95: #{tpu_custom_call.1} parent=1 // pred_check_branch
      %808 = sbr.rel (0) target = $region97
    $region96: #{tpu_custom_call.1} parent=1 // pred_region
      %s810 = ssub.s32 32, 32
      %811 = vsyncadd [#allocation19], %s810
      %s813 = sshll.u32 [#allocation18], 4
      %s814 = int_to_ptr.vmem [resolvable:$true] %s813
      %816 = dma.vmem_to_hbm [thread:$0]  %s814, 32, %s14, [#allocation19]
    $region97: #{tpu_custom_call.1} parent=1 // pred_fallthru
      _
    // Predicated region
    $region98: #{tpu_custom_call.1} parent=1 // pred_check
      _
    $region99: #{tpu_custom_call.1} parent=1 // pred_check_branch
      %818 = sbr.rel (0) target = $region101
    $region100: #{tpu_custom_call.1} parent=1 // pred_region
      %819 = dma.done [#allocation4], 32
    $region101: #{tpu_custom_call.1} parent=1 // pred_fallthru
      _
    // Predicated region
    $region102: #{tpu_custom_call.1} parent=1 // pred_check
      _
    $region103: #{tpu_custom_call.1} parent=1 // pred_check_branch
      %821 = sbr.rel (0) target = $region105
    $region104: #{tpu_custom_call.1} parent=1 // pred_region
      %822 = dma.done [#allocation19], 32
    $region105: #{tpu_custom_call.1} parent=1 // pred_fallthru
      _
    %823 = vsyncpa [#allocation3], 1
    %824 = vsyncpa [#allocation6], 1
    %825 = vsyncpa [#allocation9], 1
    %826 = vsyncpa [#allocation12], 1
    %827 = vsyncpa [#allocation15], 1
    %828 = vsyncpa [#allocation4], 1
    %829 = vsyncpa [#allocation19], 1

// kernel: tpu_custom_call.1
$region0: #{tpu_custom_call.1}
  #allocation0 [shape = 'u32[]', space=smem, size = 0x4, offset = 0x4, fixed_abs, tag = 'smem constant byte address 0x4 - core index']
  #allocation1 [shape = 'u32[144,128]{1,0:T(1,128)}', space=vmem, size = 0x12000, scoped, tag = 'internal scratch']
  %s0 = inlined_call_operand.hbm [shape: f32[2,32], index: 0, kind: input, shape index: {}]
  %s1 = inlined_call_operand.hbm [shape: f32[1,2,32], index: 1, kind: input, shape index: {}]
  %s2 = inlined_call_operand.hbm [shape: f32[2,8,32], index: 2, kind: input, shape index: {}]
  %s3 = inlined_call_operand.vmem [shape: f32[1,2,32], index: 3, kind: input, shape index: {}]
  %s4 = inlined_call_operand.hbm [shape: f32[32,32], index: 4, kind: input, shape index: {}]
  %s5 = inlined_call_operand.hbm [shape: f32[32,32], index: 5, kind: input, shape index: {}]
  %s6 = inlined_call_operand.hbm [shape: f32[32,32], index: 6, kind: input, shape index: {}]
  %s7 = inlined_call_operand.vmem [shape: f32[1,32], index: 7, kind: input, shape index: {}]
  %s8 = inlined_call_operand.vmem [shape: f32[1,1,32], index: 8, kind: input, shape index: {}]
  %s9 = inlined_call_operand.hbm [shape: f32[32,128], index: 9, kind: input, shape index: {}]
  %s10 = inlined_call_operand.hbm [shape: f32[32,128], index: 10, kind: input, shape index: {}]
  %s11 = inlined_call_operand.hbm [shape: f32[32,128], index: 11, kind: input, shape index: {}]
  %s12 = inlined_call_operand.vmem [shape: f32[1,128], index: 12, kind: input, shape index: {}]
  %s13 = inlined_call_operand.hbm [shape: f32[2,32], index: 13, kind: output, shape index: {0}]
  %s14 = inlined_call_operand.hbm [shape: f32[1,2,32], index: 14, kind: output, shape index: {1}]
  %15 = xla_tuple %s13, %s14
  %s16 = sld [smem:[#allocation0]]
  $region106: #{tpu_custom_call.1} parent=0
    _
  %s18 = ssub.s32 1, %s16
  %s19 = scalar_select 0, %s18, %s16
  $region1: #{tpu_custom_call.1} parent=0
    #allocation2 [shape = 'u8[1024]{0}', space=vmem, size = 0x400, scoped, tag = 'input window, operand 0, single buffered']
    #allocation3 [shape = 's32[1]{0}', space=sflag, size = 0x4, scoped, tag = 'scoped memory for tpu_custom_call.1']
    #allocation4 [shape = 's32[1]{0}', space=sflag, size = 0x4, scoped, tag = 'scoped memory for tpu_custom_call.1']
    #allocation5 [shape = 'u8[1024]{0}', space=vmem, size = 0x400, scoped, tag = 'input window, operand 1, single buffered']
    #allocation6 [shape = 's32[1]{0}', space=sflag, size = 0x4, scoped, tag = 'scoped memory for tpu_custom_call.1']
    #allocation7 [shape = 'u8[8192]{0}', space=vmem, size = 0x2000, scoped, tag = 'input window, operand 2, single buffered']
    #allocation8 [shape = 'u8[16384]{0}', space=vmem, size = 0x4000, scoped, tag = 'input window, operand 4, single buffered']
    #allocation9 [shape = 's32[1]{0}', space=sflag, size = 0x4, scoped, tag = 'scoped memory for tpu_custom_call.1']
    #allocation10 [shape = 'u8[16384]{0}', space=vmem, size = 0x4000, scoped, tag = 'input window, operand 5, single buffered']
    #allocation11 [shape = 'u8[16384]{0}', space=vmem, size = 0x4000, scoped, tag = 'input window, operand 6, single buffered']
    #allocation12 [shape = 's32[1]{0}', space=sflag, size = 0x4, scoped, tag = 'scoped memory for tpu_custom_call.1']
    #allocation13 [shape = 'u8[16384]{0}', space=vmem, size = 0x4000, scoped, tag = 'input window, operand 9, single buffered']
    #allocation14 [shape = 'u8[16384]{0}', space=vmem, size = 0x4000, scoped, tag = 'input window, operand 10, single buffered']
    #allocation15 [shape = 's32[1]{0}', space=sflag, size = 0x4, scoped, tag = 'scoped memory for tpu_custom_call.1']
    #allocation16 [shape = 'u8[16384]{0}', space=vmem, size = 0x4000, scoped, tag = 'input window, operand 11, single buffered']
    #allocation17 [shape = 'u8[1024]{0}', space=vmem, size = 0x400, scoped, tag = 'output window, operand 0, single buffered']
    #allocation18 [shape = 'u8[1024]{0}', space=vmem, size = 0x400, scoped, tag = 'output window, operand 1, single buffered']
    #allocation19 [shape = 's32[1]{0}', space=sflag, size = 0x4, scoped, tag = 'scoped memory for tpu_custom_call.1']
    %20 = vsyncpa [#allocation3], 0
    %21 = vsyncpa [#allocation6], 0
    %22 = vsyncpa [#allocation9], 0
    %23 = vsyncpa [#allocation12], 0
    %24 = vsyncpa [#allocation15], 0
    %25 = vsyncpa [#allocation4], 0
    %26 = vsyncpa [#allocation19], 0
    // Predicated region
    $region2: #{tpu_custom_call.1} parent=1 // pred_check
      _
    $region3: #{tpu_custom_call.1} parent=1 // pred_check_branch
      %28 = sbr.rel (0) target = $region5
    $region4: #{tpu_custom_call.1} parent=1 // pred_region
      %s30 = ssub.s32 32, 32
      %31 = vsyncadd [#allocation3], %s30
      %s33 = sshll.u32 [#allocation2], 4
      %s34 = int_to_ptr.vmem [resolvable:$true] %s33
      %36 = dma.hbm_to_vmem [thread:$0]  %s0, 32, %s34, [#allocation3]
    $region5: #{tpu_custom_call.1} parent=1 // pred_fallthru
      _
    // Predicated region
    $region6: #{tpu_custom_call.1} parent=1 // pred_check
      _
    $region7: #{tpu_custom_call.1} parent=1 // pred_check_branch
      %38 = sbr.rel (0) target = $region9
    $region8: #{tpu_custom_call.1} parent=1 // pred_region
      %s40 = ssub.s32 32, 32
      %41 = vsyncadd [#allocation6], %s40
      %s43 = sshll.u32 [#allocation5], 4
      %s44 = int_to_ptr.vmem [resolvable:$true] %s43
      %46 = dma.hbm_to_vmem [thread:$0]  %s1, 32, %s44, [#allocation6]
    $region9: #{tpu_custom_call.1} parent=1 // pred_fallthru
      _
    // Predicated region
    $region10: #{tpu_custom_call.1} parent=1 // pred_check
      _
    $region11: #{tpu_custom_call.1} parent=1 // pred_check_branch
      %48 = sbr.rel (0) target = $region13
    $region12: #{tpu_custom_call.1} parent=1 // pred_region
      %s50 = ssub.s32 256, 256
      %51 = vsyncadd [#allocation6], %s50
      %s52 = sshll.u32 [#allocation7], 4
      %s53 = int_to_ptr.vmem [resolvable:$true] %s52
      %58 = dma.hbm_to_vmem [thread:$0]  %s2, 256, %s53, [#allocation6], 128, 128, 8
    $region13: #{tpu_custom_call.1} parent=1 // pred_fallthru
      _
    // Predicated region
    $region14: #{tpu_custom_call.1} parent=1 // pred_check
      _
    $region15: #{tpu_custom_call.1} parent=1 // pred_check_branch
      %60 = sbr.rel (0) target = $region17
    $region16: #{tpu_custom_call.1} parent=1 // pred_region
      _
    $region17: #{tpu_custom_call.1} parent=1 // pred_fallthru
      _
    // Predicated region
    $region18: #{tpu_custom_call.1} parent=1 // pred_check
      _
    $region19: #{tpu_custom_call.1} parent=1 // pred_check_branch
      %62 = sbr.rel (0) target = $region21
    $region20: #{tpu_custom_call.1} parent=1 // pred_region
      %s64 = ssub.s32 512, 512
      %65 = vsyncadd [#allocation9], %s64
      %s66 = sshll.u32 [#allocation8], 4
      %s67 = int_to_ptr.vmem [resolvable:$true] %s66
      %72 = dma.hbm_to_vmem [thread:$0]  %s4, 512, %s67, [#allocation9], 128, 128, 8
    $region21: #{tpu_custom_call.1} parent=1 // pred_fallthru
      _
    // Predicated region
    $region22: #{tpu_custom_call.1} parent=1 // pred_check
      _
    $region23: #{tpu_custom_call.1} parent=1 // pred_check_branch
      %74 = sbr.rel (0) target = $region25
    $region24: #{tpu_custom_call.1} parent=1 // pred_region
      %s76 = ssub.s32 512, 512
      %77 = vsyncadd [#allocation9], %s76
      %s78 = sshll.u32 [#allocation10], 4
      %s79 = int_to_ptr.vmem [resolvable:$true] %s78
      %84 = dma.hbm_to_vmem [thread:$0]  %s5, 512, %s79, [#allocation9], 128, 128, 8
    $region25: #{tpu_custom_call.1} parent=1 // pred_fallthru
      _
    // Predicated region
    $region26: #{tpu_custom_call.1} parent=1 // pred_check
      _
    $region27: #{tpu_custom_call.1} parent=1 // pred_check_branch
      %86 = sbr.rel (0) target = $region29
    $region28: #{tpu_custom_call.1} parent=1 // pred_region
      %s88 = ssub.s32 512, 512
      %89 = vsyncadd [#allocation12], %s88
      %s90 = sshll.u32 [#allocation11], 4
      %s91 = int_to_ptr.vmem [resolvable:$true] %s90
      %96 = dma.hbm_to_vmem [thread:$0]  %s6, 512, %s91, [#allocation12], 128, 128, 8
    $region29: #{tpu_custom_call.1} parent=1 // pred_fallthru
      _
    // Predicated region
    $region30: #{tpu_custom_call.1} parent=1 // pred_check
      _
    $region31: #{tpu_custom_call.1} parent=1 // pred_check_branch
      %98 = sbr.rel (0) target = $region33
    $region32: #{tpu_custom_call.1} parent=1 // pred_region
      _
    $region33: #{tpu_custom_call.1} parent=1 // pred_fallthru
      _
    // Predicated region
    $region34: #{tpu_custom_call.1} parent=1 // pred_check
      _
    $region35: #{tpu_custom_call.1} parent=1 // pred_check_branch
      %100 = sbr.rel (0) target = $region37
    $region36: #{tpu_custom_call.1} parent=1 // pred_region
      _
    $region37: #{tpu_custom_call.1} parent=1 // pred_fallthru
      _
    // Predicated region
    $region38: #{tpu_custom_call.1} parent=1 // pred_check
      _
    $region39: #{tpu_custom_call.1} parent=1 // pred_check_branch
      %102 = sbr.rel (0) target = $region41
    $region40: #{tpu_custom_call.1} parent=1 // pred_region
      %s104 = ssub.s32 512, 512
      %105 = vsyncadd [#allocation12], %s104
      %s106 = sshll.u32 [#allocation13], 4
      %s107 = int_to_ptr.vmem [resolvable:$true] %s106
      %112 = dma.hbm_to_vmem [thread:$0]  %s9, 512, %s107, [#allocation12], 128, 128, 8
    $region41: #{tpu_custom_call.1} parent=1 // pred_fallthru
      _
    // Predicated region
    $region42: #{tpu_custom_call.1} parent=1 // pred_check
      _
    $region43: #{tpu_custom_call.1} parent=1 // pred_check_branch
      %114 = sbr.rel (0) target = $region45
    $region44: #{tpu_custom_call.1} parent=1 // pred_region
      %s116 = ssub.s32 512, 512
      %117 = vsyncadd [#allocation15], %s116
      %s118 = sshll.u32 [#allocation14], 4
      %s119 = int_to_ptr.vmem [resolvable:$true] %s118
      %124 = dma.hbm_to_vmem [thread:$0]  %s10, 512, %s119, [#allocation15], 128, 128, 8
    $region45: #{tpu_custom_call.1} parent=1 // pred_fallthru
      _
    // Predicated region
    $region46: #{tpu_custom_call.1} parent=1 // pred_check
      _
    $region47: #{tpu_custom_call.1} parent=1 // pred_check_branch
      %126 = sbr.rel (0) target = $region49
    $region48: #{tpu_custom_call.1} parent=1 // pred_region
      %s128 = ssub.s32 512, 512
      %129 = vsyncadd [#allocation15], %s128
      %s130 = sshll.u32 [#allocation16], 4
      %s131 = int_to_ptr.vmem [resolvable:$true] %s130
      %136 = dma.hbm_to_vmem [thread:$0]  %s11, 512, %s131, [#allocation15], 128, 128, 8
    $region49: #{tpu_custom_call.1} parent=1 // pred_fallthru
      _
    // Predicated region
    $region50: #{tpu_custom_call.1} parent=1 // pred_check
      _
    $region51: #{tpu_custom_call.1} parent=1 // pred_check_branch
      %138 = sbr.rel (0) target = $region53
    $region52: #{tpu_custom_call.1} parent=1 // pred_region
      _
    $region53: #{tpu_custom_call.1} parent=1 // pred_fallthru
      _
    // Predicated region
    $region54: #{tpu_custom_call.1} parent=1 // pred_check
      _
    $region55: #{tpu_custom_call.1} parent=1 // pred_check_branch
      %140 = sbr.rel (0) target = $region57
    $region56: #{tpu_custom_call.1} parent=1 // pred_region
      %141 = dma.done [#allocation3], 32
    $region57: #{tpu_custom_call.1} parent=1 // pred_fallthru
      _
    // Predicated region
    $region58: #{tpu_custom_call.1} parent=1 // pred_check
      _
    $region59: #{tpu_custom_call.1} parent=1 // pred_check_branch
      %143 = sbr.rel (0) target = $region61
    $region60: #{tpu_custom_call.1} parent=1 // pred_region
      %144 = dma.done [#allocation6], 32
    $region61: #{tpu_custom_call.1} parent=1 // pred_fallthru
      _
    // Predicated region
    $region62: #{tpu_custom_call.1} parent=1 // pred_check
      _
    $region63: #{tpu_custom_call.1} parent=1 // pred_check_branch
      %146 = sbr.rel (0) target = $region65
    $region64: #{tpu_custom_call.1} parent=1 // pred_region
      %147 = dma.done [#allocation6], 256
    $region65: #{tpu_custom_call.1} parent=1 // pred_fallthru
      _
    // Predicated region
    $region66: #{tpu_custom_call.1} parent=1 // pred_check
      _
    $region67: #{tpu_custom_call.1} parent=1 // pred_check_branch
      %149 = sbr.rel (0) target = $region69
    $region68: #{tpu_custom_call.1} parent=1 // pred_region
      %150 = dma.done [#allocation9], 512
    $region69: #{tpu_custom_call.1} parent=1 // pred_fallthru
      _
    // Predicated region
    $region70: #{tpu_custom_call.1} parent=1 // pred_check
      _
    $region71: #{tpu_custom_call.1} parent=1 // pred_check_branch
      %152 = sbr.rel (0) target = $region73
    $region72: #{tpu_custom_call.1} parent=1 // pred_region
      %153 = dma.done [#allocation9], 512
    $region73: #{tpu_custom_call.1} parent=1 // pred_fallthru
      _
    // Predicated region
    $region74: #{tpu_custom_call.1} parent=1 // pred_check
      _
    $region75: #{tpu_custom_call.1} parent=1 // pred_check_branch
      %155 = sbr.rel (0) target = $region77
    $region76: #{tpu_custom_call.1} parent=1 // pred_region
      %156 = dma.done [#allocation12], 512
    $region77: #{tpu_custom_call.1} parent=1 // pred_fallthru
      _
    // Predicated region
    $region78: #{tpu_custom_call.1} parent=1 // pred_check
      _
    $region79: #{tpu_custom_call.1} parent=1 // pred_check_branch
      %158 = sbr.rel (0) target = $region81
    $region80: #{tpu_custom_call.1} parent=1 // pred_region
      %159 = dma.done [#allocation12], 512
    $region81: #{tpu_custom_call.1} parent=1 // pred_fallthru
      _
    // Predicated region
    $region82: #{tpu_custom_call.1} parent=1 // pred_check
      _
    $region83: #{tpu_custom_call.1} parent=1 // pred_check_branch
      %161 = sbr.rel (0) target = $region85
    $region84: #{tpu_custom_call.1} parent=1 // pred_region
      %162 = dma.done [#allocation15], 512
    $region85: #{tpu_custom_call.1} parent=1 // pred_fallthru
      _
    // Predicated region
    $region86: #{tpu_custom_call.1} parent=1 // pred_check
      _
    $region87: #{tpu_custom_call.1} parent=1 // pred_check_branch
      %164 = sbr.rel (0) target = $region89
    $region88: #{tpu_custom_call.1} parent=1 // pred_region
      %165 = dma.done [#allocation15], 512
    $region89: #{tpu_custom_call.1} parent=1 // pred_fallthru
      _
    %v166 = vld [vmem:[#allocation2] sm:$0x3]
    %v167 = vld [vmem:[#allocation5] sm:$0x3]
    %v168 = vld [vmem:[#allocation7] sm:$0xff]
    %v169 = vld [vmem:[#allocation7 + $0x8] sm:$0xff]
    %v170 = vld [vmem:[#allocation10] sm:$0xff]
    %v171 = vld [vmem:[#allocation10 + $0x8] sm:$0xff]
    %v172 = vld [vmem:[#allocation10 + $0x10] sm:$0xff]
    %v173 = vld [vmem:[#allocation10 + $0x18] sm:$0xff]
    %v174 = vld [vmem:[#allocation11] sm:$0xff]
    %v175 = vld [vmem:[#allocation11 + $0x8] sm:$0xff]
    %v176 = vld [vmem:[#allocation11 + $0x10] sm:$0xff]
    %v177 = vld [vmem:[#allocation11 + $0x18] sm:$0xff]
    %vm178 = vcmask 261120
    %v180 = vsel %vm178, %v167, 0
    %182 = vmatprep.subr.mxu0 0.0
    %183 = vmatpush1.msra.mxu0 0.0
    %184 = vmatprep.subr.mxu0 0.0
    %185 = vmatpush1.msra.mxu0 0.0
    %186 = vmatprep.subr.mxu0 0.0
    %187 = vmatpush1.msra.mxu0 0.0
    %188 = vmatprep.subr.mxu0 0.0
    %189 = vmatpush1.msra.mxu0 0.0
    %190 = vmatprep.subr.mxu0 0.0
    %191 = vmatpush1.msra.mxu0 0.0
    %192 = vmatprep.subr.mxu0 0.0
    %193 = vmatpush1.msra.mxu0 0.0
    %194 = vmatprep.subr.mxu0 0.0
    %195 = vmatpush1.msra.mxu0 0.0
    %196 = vmatprep.subr.mxu0 0.0
    %197 = vmatpush1.msra.mxu0 0.0
    %198 = vmatprep.subr.mxu0 0.0
    %199 = vmatpush1.msra.mxu0 0.0
    %200 = vmatprep.subr.mxu0 0.0
    %201 = vmatpush1.msra.mxu0 0.0
    %202 = vmatprep.subr.mxu0 0.0
    %203 = vmatpush1.msra.mxu0 0.0
    %204 = vmatprep.subr.mxu0 0.0
    %205 = vmatpush1.msra.mxu0 0.0
    %206 = vmatprep.subr.mxu0 0.0
    %207 = vmatpush1.msra.mxu0 %v177
    %208 = vmatprep.subr.mxu0 0.0
    %209 = vmatpush1.msra.mxu0 %v176
    %210 = vmatprep.subr.mxu0 0.0
    %211 = vmatpush1.msra.mxu0 %v175
    %212 = vmatprep.subr.mxu0 0.0
    %213 = vmatpush1.msra.mxu0 %v174
    %214 = vmatprep.subr.mxu0 0.0
    %215 = vmatpush2.msra.mxu0 0.0
    %216 = vmatprep.subr.mxu0 0.0
    %217 = vmatpush2.msra.mxu0 0.0
    %218 = vmatprep.subr.mxu0 0.0
    %219 = vmatpush2.msra.mxu0 0.0
    %220 = vmatprep.subr.mxu0 0.0
    %221 = vmatpush2.msra.mxu0 0.0
    %222 = vmatprep.subr.mxu0 0.0
    %223 = vmatpush2.msra.mxu0 0.0
    %224 = vmatprep.subr.mxu0 0.0
    %225 = vmatpush2.msra.mxu0 0.0
    %226 = vmatprep.subr.mxu0 0.0
    %227 = vmatpush2.msra.mxu0 0.0
    %228 = vmatprep.subr.mxu0 0.0
    %229 = vmatpush2.msra.mxu0 0.0
    %230 = vmatprep.subr.mxu0 0.0
    %231 = vmatpush2.msra.mxu0 0.0
    %232 = vmatprep.subr.mxu0 0.0
    %233 = vmatpush2.msra.mxu0 0.0
    %234 = vmatprep.subr.mxu0 0.0
    %235 = vmatpush2.msra.mxu0 0.0
    %236 = vmatprep.subr.mxu0 0.0
    %237 = vmatpush2.msra.mxu0 0.0
    %238 = vmatprep.subr.mxu0 0.0
    %239 = vmatpush2.msra.mxu0 0.0
    %240 = vmatprep.subr.mxu0 0.0
    %241 = vmatpush2.msra.mxu0 0.0
    %242 = vmatprep.subr.mxu0 0.0
    %243 = vmatpush2.msra.mxu0 0.0
    %244 = vmatprep.subr.mxu0 0.0
    %245 = vmatpush2.msra.mxu0 0.0
    %246 = vmatprep.mubr.f32.mxu0 0.0
    %247 = vmatmul.mubr.f32.gmra.mxu0 %v180
    %v248 = vpop.f32.mrf.mxu0
    %v249 = vadd.f32 0.0, %v248
    %v250 = vpop.f32.mrf.mxu0
    %251 = vdwg.mxu0
    %v253 = vsel %vm178, %v166, 0
    %255 = vmatprep.subr.mxu0 0.0
    %256 = vmatpush1.msra.mxu0 0.0
    %257 = vmatprep.subr.mxu0 0.0
    %258 = vmatpush1.msra.mxu0 0.0
    %259 = vmatprep.subr.mxu0 0.0
    %260 = vmatpush1.msra.mxu0 0.0
    %261 = vmatprep.subr.mxu0 0.0
    %262 = vmatpush1.msra.mxu0 0.0
    %263 = vmatprep.subr.mxu0 0.0
    %264 = vmatpush1.msra.mxu0 0.0
    %265 = vmatprep.subr.mxu0 0.0
    %266 = vmatpush1.msra.mxu0 0.0
    %267 = vmatprep.subr.mxu0 0.0
    %268 = vmatpush1.msra.mxu0 0.0
    %269 = vmatprep.subr.mxu0 0.0
    %270 = vmatpush1.msra.mxu0 0.0
    %271 = vmatprep.subr.mxu0 0.0
    %272 = vmatpush1.msra.mxu0 0.0
    %273 = vmatprep.subr.mxu0 0.0
    %274 = vmatpush1.msra.mxu0 0.0
    %275 = vmatprep.subr.mxu0 0.0
    %276 = vmatpush1.msra.mxu0 0.0
    %277 = vmatprep.subr.mxu0 0.0
    %278 = vmatpush1.msra.mxu0 0.0
    %279 = vmatprep.subr.mxu0 0.0
    %280 = vmatpush1.msra.mxu0 %v173
    %281 = vmatprep.subr.mxu0 0.0
    %282 = vmatpush1.msra.mxu0 %v172
    %283 = vmatprep.subr.mxu0 0.0
    %284 = vmatpush1.msra.mxu0 %v171
    %285 = vmatprep.subr.mxu0 0.0
    %286 = vmatpush1.msra.mxu0 %v170
    %287 = vmatprep.subr.mxu0 0.0
    %288 = vmatpush2.msra.mxu0 0.0
    %289 = vmatprep.subr.mxu0 0.0
    %290 = vmatpush2.msra.mxu0 0.0
    %291 = vmatprep.subr.mxu0 0.0
    %292 = vmatpush2.msra.mxu0 0.0
    %293 = vmatprep.subr.mxu0 0.0
    %294 = vmatpush2.msra.mxu0 0.0
    %295 = vmatprep.subr.mxu0 0.0
    %296 = vmatpush2.msra.mxu0 0.0
    %297 = vmatprep.subr.mxu0 0.0
    %298 = vmatpush2.msra.mxu0 0.0
    %299 = vmatprep.subr.mxu0 0.0
    %300 = vmatpush2.msra.mxu0 0.0
    %301 = vmatprep.subr.mxu0 0.0
    %302 = vmatpush2.msra.mxu0 0.0
    %303 = vmatprep.subr.mxu0 0.0
    %304 = vmatpush2.msra.mxu0 0.0
    %305 = vmatprep.subr.mxu0 0.0
    %306 = vmatpush2.msra.mxu0 0.0
    %307 = vmatprep.subr.mxu0 0.0
    %308 = vmatpush2.msra.mxu0 0.0
    %309 = vmatprep.subr.mxu0 0.0
    %310 = vmatpush2.msra.mxu0 0.0
    %311 = vmatprep.subr.mxu0 0.0
    %312 = vmatpush2.msra.mxu0 0.0
    %313 = vmatprep.subr.mxu0 0.0
    %314 = vmatpush2.msra.mxu0 0.0
    %315 = vmatprep.subr.mxu0 0.0
    %316 = vmatpush2.msra.mxu0 0.0
    %317 = vmatprep.subr.mxu0 0.0
    %318 = vmatpush2.msra.mxu0 0.0
    %319 = vmatprep.mubr.f32.mxu0 0.0
    %320 = vmatmul.mubr.f32.gmra.mxu0 %v253
    %v321 = vpop.f32.mrf.mxu0
    %v322 = vadd.f32 %v249, %v321
    %v323 = vpop.f32.mrf.mxu0
    %324 = vdwg.mxu0
    %v325 = vld [vmem:[%s7] sm:$0x1]
    %v327 = vlaneseq
    %v328 = vshrl.u32 %v327, 7
    %v329 = vsub.s32 0, %v328
    %v330 = vrot.slane %v325, %v329
    %v332 = vadd.f32 %v322, %v330
    %v333 = vld [vmem:[#allocation8] sm:$0xff]
    %v334 = vld [vmem:[#allocation8 + $0x8] sm:$0xff]
    %v335 = vld [vmem:[#allocation8 + $0x10] sm:$0xff]
    %v336 = vld [vmem:[#allocation8 + $0x18] sm:$0xff]
    %v338 = vsel %vm178, %v168, 0
    %v341 = vsel %vm178, %v169, 0
    %343 = vmatprep.subr.mxu0 0.0
    %344 = vmatpush1.msra.mxu0 0.0
    %345 = vmatprep.subr.mxu0 0.0
    %346 = vmatpush1.msra.mxu0 0.0
    %347 = vmatprep.subr.mxu0 0.0
    %348 = vmatpush1.msra.mxu0 0.0
    %349 = vmatprep.subr.mxu0 0.0
    %350 = vmatpush1.msra.mxu0 0.0
    %351 = vmatprep.subr.mxu0 0.0
    %352 = vmatpush1.msra.mxu0 0.0
    %353 = vmatprep.subr.mxu0 0.0
    %354 = vmatpush1.msra.mxu0 0.0
    %355 = vmatprep.subr.mxu0 0.0
    %356 = vmatpush1.msra.mxu0 0.0
    %357 = vmatprep.subr.mxu0 0.0
    %358 = vmatpush1.msra.mxu0 0.0
    %359 = vmatprep.subr.mxu0 0.0
    %360 = vmatpush1.msra.mxu0 0.0
    %361 = vmatprep.subr.mxu0 0.0
    %362 = vmatpush1.msra.mxu0 0.0
    %363 = vmatprep.subr.mxu0 0.0
    %364 = vmatpush1.msra.mxu0 0.0
    %365 = vmatprep.subr.mxu0 0.0
    %366 = vmatpush1.msra.mxu0 0.0
    %367 = vmatprep.subr.mxu0 0.0
    %368 = vmatpush1.msra.mxu0 %v336
    %369 = vmatprep.subr.mxu0 0.0
    %370 = vmatpush1.msra.mxu0 %v335
    %371 = vmatprep.subr.mxu0 0.0
    %372 = vmatpush1.msra.mxu0 %v334
    %373 = vmatprep.subr.mxu0 0.0
    %374 = vmatpush1.msra.mxu0 %v333
    %375 = vmatprep.subr.mxu0 0.0
    %376 = vmatpush2.msra.mxu0 0.0
    %377 = vmatprep.subr.mxu0 0.0
    %378 = vmatpush2.msra.mxu0 0.0
    %379 = vmatprep.subr.mxu0 0.0
    %380 = vmatpush2.msra.mxu0 0.0
    %381 = vmatprep.subr.mxu0 0.0
    %382 = vmatpush2.msra.mxu0 0.0
    %383 = vmatprep.subr.mxu0 0.0
    %384 = vmatpush2.msra.mxu0 0.0
    %385 = vmatprep.subr.mxu0 0.0
    %386 = vmatpush2.msra.mxu0 0.0
    %387 = vmatprep.subr.mxu0 0.0
    %388 = vmatpush2.msra.mxu0 0.0
    %389 = vmatprep.subr.mxu0 0.0
    %390 = vmatpush2.msra.mxu0 0.0
    %391 = vmatprep.subr.mxu0 0.0
    %392 = vmatpush2.msra.mxu0 0.0
    %393 = vmatprep.subr.mxu0 0.0
    %394 = vmatpush2.msra.mxu0 0.0
    %395 = vmatprep.subr.mxu0 0.0
    %396 = vmatpush2.msra.mxu0 0.0
    %397 = vmatprep.subr.mxu0 0.0
    %398 = vmatpush2.msra.mxu0 0.0
    %399 = vmatprep.subr.mxu0 0.0
    %400 = vmatpush2.msra.mxu0 0.0
    %401 = vmatprep.subr.mxu0 0.0
    %402 = vmatpush2.msra.mxu0 0.0
    %403 = vmatprep.subr.mxu0 0.0
    %404 = vmatpush2.msra.mxu0 0.0
    %405 = vmatprep.subr.mxu0 0.0
    %406 = vmatpush2.msra.mxu0 0.0
    %407 = vmatprep.mubr.f32.mxu0 0.0
    %408 = vmatmul.mubr.f32.gmra.mxu0 %v338
    %v409 = vpop.f32.mrf.mxu0
    %v410 = vadd.f32 0.0, %v409
    %v411 = vpop.f32.mrf.mxu0
    %412 = vmatprep.mubr.f32.mxu0 0.0
    %413 = vmatmul.mubr.f32.gmra.mxu0 %v341
    %v414 = vpop.f32.mrf.mxu0
    %v415 = vadd.f32 0.0, %v414
    %v416 = vpop.f32.mrf.mxu0
    %417 = vdwg.mxu0
    %v420 = vunpack.c.l.s4 1966171168
    %v421 = vunpack.c.0.s8 %v420
    %v422 = vlaneseq
    %v423 = vshrl.u32 %v422, 7
    %v424 = vsub.s32 %v421, %v423
    %v425 = vrot.slane %v332, %v424
    %v426 = vcombine.high %v425, %v425
    %v428 = vunpack.c.l.s4 1966171168
    %v429 = vunpack.c.0.s8 %v428
    %v430 = vlaneseq
    %v431 = vshrl.u32 %v430, 7
    %v432 = vsub.s32 %v429, %v431
    %v433 = vrot.slane %v425, %v432
    %v435 = vunpack.c.l.s4 1966171168
    %v436 = vunpack.c.0.s8 %v435
    %v437 = vlaneseq
    %v438 = vshrl.u32 %v437, 7
    %v439 = vsub.s32 %v436, %v438
    %v440 = vrot.slane %v426, %v439
    %v441 = vlaneseq
    %v442 = vshrl.u32 %v441, 7
    %v443 = vsub.s32 0, %v442
    %v444 = vrot.slane %v433, %v443
    %v445 = vlaneseq
    %v446 = vshrl.u32 %v445, 7
    %v447 = vsub.s32 0, %v446
    %v448 = vrot.slane %v440, %v447
    %v451 = vadd.f32 %v410, %v444
    %v452 = vadd.f32 %v415, %v448
    %v453 = vtanh.pop %v451
    %v454 = vtanh.pop %v452
    %v455 = vld [vmem:[%s8] sm:$0x1]
    %v457 = vlaneseq
    %v458 = vshrl.u32 %v457, 7
    %v459 = vsub.s32 0, %v458
    %v460 = vrot.slane %v455, %v459
    %v462 = vmul.f32 %v453, %v460
    %v463 = vmul.f32 %v454, %v460
    %v464 = vsel %vm178, %v462, 0.0
    %465 = vadd.xlane.f32.xlu0 %v464
    %v466 = vpop.xlane.xlu0 %465
    %v467 = vsel %vm178, %v463, 0.0
    %468 = vadd.xlane.f32.xlu0 %v467
    %v469 = vpop.xlane.xlu0 %468
    %v470 = vrot.slane %v466, 4
    %v471 = vmax.f32 %v466, %v470
    %v472 = vrot.slane %v471, 2
    %v473 = vmax.f32 %v471, %v472
    %v474 = vrot.slane %v473, 1
    %v475 = vmax.f32 %v473, %v474
    %v476 = vrot.slane %v469, 4
    %v477 = vmax.f32 %v469, %v476
    %v478 = vrot.slane %v477, 2
    %v479 = vmax.f32 %v477, %v478
    %v480 = vrot.slane %v479, 1
    %v481 = vmax.f32 %v479, %v480
    %v482 = vsub.f32 %v466, %v475
    %v483 = vsub.f32 %v469, %v481
    %v484 = vmul.f32 %v482, 1.442695
    %v485 = vpow.pop %v484
    %v486 = vmul.f32 %v483, 1.442695
    %v487 = vpow.pop %v486
    %v488 = vrot.slane %v485, 4
    %v489 = vadd.f32 %v485, %v488
    %v490 = vrot.slane %v489, 2
    %v491 = vadd.f32 %v489, %v490
    %v492 = vrot.slane %v491, 1
    %v493 = vadd.f32 %v491, %v492
    %v494 = vrot.slane %v487, 4
    %v495 = vadd.f32 %v487, %v494
    %v496 = vrot.slane %v495, 2
    %v497 = vadd.f32 %v495, %v496
    %v498 = vrot.slane %v497, 1
    %v499 = vadd.f32 %v497, %v498
    %v500 = vrcp.pop %v493
    %v501 = vmul.f32 %v485, %v500
    %v502 = vrcp.pop %v499
    %v503 = vmul.f32 %v487, %v502
    %v504 = vmul.f32 %v501, %v168
    %v505 = vmul.f32 %v503, %v169
    %v506 = vsel %vm178, %v504, 0.0
    %v507 = vrot.slane %v506, 4
    %v508 = vadd.f32 %v506, %v507
    %v509 = vrot.slane %v508, 2
    %v510 = vadd.f32 %v508, %v509
    %v511 = vrot.slane %v510, 1
    %v512 = vadd.f32 %v510, %v511
    %v513 = vsel %vm178, %v505, 0.0
    %v514 = vrot.slane %v513, 4
    %v515 = vadd.f32 %v513, %v514
    %v516 = vrot.slane %v515, 2
    %v517 = vadd.f32 %v515, %v516
    %v518 = vrot.slane %v517, 1
    %v519 = vadd.f32 %v517, %v518
    %v520 = vld [vmem:[#allocation13] sm:$0xff]
    %v521 = vld [vmem:[#allocation13 + $0x8] sm:$0xff]
    %v522 = vld [vmem:[#allocation13 + $0x10] sm:$0xff]
    %v523 = vld [vmem:[#allocation13 + $0x18] sm:$0xff]
    %v524 = vld [vmem:[#allocation14] sm:$0xff]
    %v525 = vld [vmem:[#allocation14 + $0x8] sm:$0xff]
    %v526 = vld [vmem:[#allocation14 + $0x10] sm:$0xff]
    %v527 = vld [vmem:[#allocation14 + $0x18] sm:$0xff]
    %528 = vmatprep.subr.mxu0 0.0
    %529 = vmatpush1.msra.mxu0 0.0
    %530 = vmatprep.subr.mxu0 0.0
    %531 = vmatpush1.msra.mxu0 0.0
    %532 = vmatprep.subr.mxu0 0.0
    %533 = vmatpush1.msra.mxu0 0.0
    %534 = vmatprep.subr.mxu0 0.0
    %535 = vmatpush1.msra.mxu0 0.0
    %536 = vmatprep.subr.mxu0 0.0
    %537 = vmatpush1.msra.mxu0 0.0
    %538 = vmatprep.subr.mxu0 0.0
    %539 = vmatpush1.msra.mxu0 0.0
    %540 = vmatprep.subr.mxu0 0.0
    %541 = vmatpush1.msra.mxu0 0.0
    %542 = vmatprep.subr.mxu0 0.0
    %543 = vmatpush1.msra.mxu0 0.0
    %544 = vmatprep.subr.mxu0 0.0
    %545 = vmatpush1.msra.mxu0 0.0
    %546 = vmatprep.subr.mxu0 0.0
    %547 = vmatpush1.msra.mxu0 0.0
    %548 = vmatprep.subr.mxu0 0.0
    %549 = vmatpush1.msra.mxu0 0.0
    %550 = vmatprep.subr.mxu0 0.0
    %551 = vmatpush1.msra.mxu0 0.0
    %552 = vmatprep.subr.mxu0 0.0
    %553 = vmatpush1.msra.mxu0 %v527
    %554 = vmatprep.subr.mxu0 0.0
    %555 = vmatpush1.msra.mxu0 %v526
    %556 = vmatprep.subr.mxu0 0.0
    %557 = vmatpush1.msra.mxu0 %v525
    %558 = vmatprep.subr.mxu0 0.0
    %559 = vmatpush1.msra.mxu0 %v524
    %560 = vmatprep.subr.mxu0 0.0
    %561 = vmatpush2.msra.mxu0 0.0
    %562 = vmatprep.subr.mxu0 0.0
    %563 = vmatpush2.msra.mxu0 0.0
    %564 = vmatprep.subr.mxu0 0.0
    %565 = vmatpush2.msra.mxu0 0.0
    %566 = vmatprep.subr.mxu0 0.0
    %567 = vmatpush2.msra.mxu0 0.0
    %568 = vmatprep.subr.mxu0 0.0
    %569 = vmatpush2.msra.mxu0 0.0
    %570 = vmatprep.subr.mxu0 0.0
    %571 = vmatpush2.msra.mxu0 0.0
    %572 = vmatprep.subr.mxu0 0.0
    %573 = vmatpush2.msra.mxu0 0.0
    %574 = vmatprep.subr.mxu0 0.0
    %575 = vmatpush2.msra.mxu0 0.0
    %576 = vmatprep.subr.mxu0 0.0
    %577 = vmatpush2.msra.mxu0 0.0
    %578 = vmatprep.subr.mxu0 0.0
    %579 = vmatpush2.msra.mxu0 0.0
    %580 = vmatprep.subr.mxu0 0.0
    %581 = vmatpush2.msra.mxu0 0.0
    %582 = vmatprep.subr.mxu0 0.0
    %583 = vmatpush2.msra.mxu0 0.0
    %584 = vmatprep.subr.mxu0 0.0
    %585 = vmatpush2.msra.mxu0 0.0
    %586 = vmatprep.subr.mxu0 0.0
    %587 = vmatpush2.msra.mxu0 0.0
    %588 = vmatprep.subr.mxu0 0.0
    %589 = vmatpush2.msra.mxu0 0.0
    %590 = vmatprep.subr.mxu0 0.0
    %591 = vmatpush2.msra.mxu0 0.0
    %592 = vmatprep.mubr.f32.mxu0 0.0
    %593 = vmatmul.mubr.f32.gmra.mxu0 %v180
    %v594 = vpop.f32.mrf.mxu0
    %v595 = vadd.f32 0.0, %v594
    %v596 = vpop.f32.mrf.mxu0
    %597 = vdwg.mxu0
    %598 = vmatprep.subr.mxu0 0.0
    %599 = vmatpush1.msra.mxu0 0.0
    %600 = vmatprep.subr.mxu0 0.0
    %601 = vmatpush1.msra.mxu0 0.0
    %602 = vmatprep.subr.mxu0 0.0
    %603 = vmatpush1.msra.mxu0 0.0
    %604 = vmatprep.subr.mxu0 0.0
    %605 = vmatpush1.msra.mxu0 0.0
    %606 = vmatprep.subr.mxu0 0.0
    %607 = vmatpush1.msra.mxu0 0.0
    %608 = vmatprep.subr.mxu0 0.0
    %609 = vmatpush1.msra.mxu0 0.0
    %610 = vmatprep.subr.mxu0 0.0
    %611 = vmatpush1.msra.mxu0 0.0
    %612 = vmatprep.subr.mxu0 0.0
    %613 = vmatpush1.msra.mxu0 0.0
    %614 = vmatprep.subr.mxu0 0.0
    %615 = vmatpush1.msra.mxu0 0.0
    %616 = vmatprep.subr.mxu0 0.0
    %617 = vmatpush1.msra.mxu0 0.0
    %618 = vmatprep.subr.mxu0 0.0
    %619 = vmatpush1.msra.mxu0 0.0
    %620 = vmatprep.subr.mxu0 0.0
    %621 = vmatpush1.msra.mxu0 0.0
    %622 = vmatprep.subr.mxu0 0.0
    %623 = vmatpush1.msra.mxu0 %v523
    %624 = vmatprep.subr.mxu0 0.0
    %625 = vmatpush1.msra.mxu0 %v522
    %626 = vmatprep.subr.mxu0 0.0
    %627 = vmatpush1.msra.mxu0 %v521
    %628 = vmatprep.subr.mxu0 0.0
    %629 = vmatpush1.msra.mxu0 %v520
    %630 = vmatprep.subr.mxu0 0.0
    %631 = vmatpush2.msra.mxu0 0.0
    %632 = vmatprep.subr.mxu0 0.0
    %633 = vmatpush2.msra.mxu0 0.0
    %634 = vmatprep.subr.mxu0 0.0
    %635 = vmatpush2.msra.mxu0 0.0
    %636 = vmatprep.subr.mxu0 0.0
    %637 = vmatpush2.msra.mxu0 0.0
    %638 = vmatprep.subr.mxu0 0.0
    %639 = vmatpush2.msra.mxu0 0.0
    %640 = vmatprep.subr.mxu0 0.0
    %641 = vmatpush2.msra.mxu0 0.0
    %642 = vmatprep.subr.mxu0 0.0
    %643 = vmatpush2.msra.mxu0 0.0
    %644 = vmatprep.subr.mxu0 0.0
    %645 = vmatpush2.msra.mxu0 0.0
    %646 = vmatprep.subr.mxu0 0.0
    %647 = vmatpush2.msra.mxu0 0.0
    %648 = vmatprep.subr.mxu0 0.0
    %649 = vmatpush2.msra.mxu0 0.0
    %650 = vmatprep.subr.mxu0 0.0
    %651 = vmatpush2.msra.mxu0 0.0
    %652 = vmatprep.subr.mxu0 0.0
    %653 = vmatpush2.msra.mxu0 0.0
    %654 = vmatprep.subr.mxu0 0.0
    %655 = vmatpush2.msra.mxu0 0.0
    %656 = vmatprep.subr.mxu0 0.0
    %657 = vmatpush2.msra.mxu0 0.0
    %658 = vmatprep.subr.mxu0 0.0
    %659 = vmatpush2.msra.mxu0 0.0
    %660 = vmatprep.subr.mxu0 0.0
    %661 = vmatpush2.msra.mxu0 0.0
    %662 = vmatprep.mubr.f32.mxu0 0.0
    %663 = vmatmul.mubr.f32.gmra.mxu0 %v253
    %v664 = vpop.f32.mrf.mxu0
    %v665 = vadd.f32 %v595, %v664
    %v666 = vpop.f32.mrf.mxu0
    %667 = vdwg.mxu0
    %v668 = vld [vmem:[#allocation16] sm:$0xff]
    %v669 = vld [vmem:[#allocation16 + $0x8] sm:$0xff]
    %v670 = vld [vmem:[#allocation16 + $0x10] sm:$0xff]
    %v671 = vld [vmem:[#allocation16 + $0x18] sm:$0xff]
    %vm674 = vcmask 1041409
    %v675 = vsel %vm674, %v519, %v512
    %v676 = vsel %vm178, %v675, 0
    %678 = vmatprep.subr.mxu0 0.0
    %679 = vmatpush1.msra.mxu0 0.0
    %680 = vmatprep.subr.mxu0 0.0
    %681 = vmatpush1.msra.mxu0 0.0
    %682 = vmatprep.subr.mxu0 0.0
    %683 = vmatpush1.msra.mxu0 0.0
    %684 = vmatprep.subr.mxu0 0.0
    %685 = vmatpush1.msra.mxu0 0.0
    %686 = vmatprep.subr.mxu0 0.0
    %687 = vmatpush1.msra.mxu0 0.0
    %688 = vmatprep.subr.mxu0 0.0
    %689 = vmatpush1.msra.mxu0 0.0
    %690 = vmatprep.subr.mxu0 0.0
    %691 = vmatpush1.msra.mxu0 0.0
    %692 = vmatprep.subr.mxu0 0.0
    %693 = vmatpush1.msra.mxu0 0.0
    %694 = vmatprep.subr.mxu0 0.0
    %695 = vmatpush1.msra.mxu0 0.0
    %696 = vmatprep.subr.mxu0 0.0
    %697 = vmatpush1.msra.mxu0 0.0
    %698 = vmatprep.subr.mxu0 0.0
    %699 = vmatpush1.msra.mxu0 0.0
    %700 = vmatprep.subr.mxu0 0.0
    %701 = vmatpush1.msra.mxu0 0.0
    %702 = vmatprep.subr.mxu0 0.0
    %703 = vmatpush1.msra.mxu0 %v671
    %704 = vmatprep.subr.mxu0 0.0
    %705 = vmatpush1.msra.mxu0 %v670
    %706 = vmatprep.subr.mxu0 0.0
    %707 = vmatpush1.msra.mxu0 %v669
    %708 = vmatprep.subr.mxu0 0.0
    %709 = vmatpush1.msra.mxu0 %v668
    %710 = vmatprep.subr.mxu0 0.0
    %711 = vmatpush2.msra.mxu0 0.0
    %712 = vmatprep.subr.mxu0 0.0
    %713 = vmatpush2.msra.mxu0 0.0
    %714 = vmatprep.subr.mxu0 0.0
    %715 = vmatpush2.msra.mxu0 0.0
    %716 = vmatprep.subr.mxu0 0.0
    %717 = vmatpush2.msra.mxu0 0.0
    %718 = vmatprep.subr.mxu0 0.0
    %719 = vmatpush2.msra.mxu0 0.0
    %720 = vmatprep.subr.mxu0 0.0
    %721 = vmatpush2.msra.mxu0 0.0
    %722 = vmatprep.subr.mxu0 0.0
    %723 = vmatpush2.msra.mxu0 0.0
    %724 = vmatprep.subr.mxu0 0.0
    %725 = vmatpush2.msra.mxu0 0.0
    %726 = vmatprep.subr.mxu0 0.0
    %727 = vmatpush2.msra.mxu0 0.0
    %728 = vmatprep.subr.mxu0 0.0
    %729 = vmatpush2.msra.mxu0 0.0
    %730 = vmatprep.subr.mxu0 0.0
    %731 = vmatpush2.msra.mxu0 0.0
    %732 = vmatprep.subr.mxu0 0.0
    %733 = vmatpush2.msra.mxu0 0.0
    %734 = vmatprep.subr.mxu0 0.0
    %735 = vmatpush2.msra.mxu0 0.0
    %736 = vmatprep.subr.mxu0 0.0
    %737 = vmatpush2.msra.mxu0 0.0
    %738 = vmatprep.subr.mxu0 0.0
    %739 = vmatpush2.msra.mxu0 0.0
    %740 = vmatprep.subr.mxu0 0.0
    %741 = vmatpush2.msra.mxu0 0.0
    %742 = vmatprep.mubr.f32.mxu0 0.0
    %743 = vmatmul.mubr.f32.gmra.mxu0 %v676
    %v744 = vpop.f32.mrf.mxu0
    %v745 = vadd.f32 0.0, %v744
    %v746 = vpop.f32.mrf.mxu0
    %747 = vdwg.mxu0
    %v748 = vadd.f32 %v665, %v745
    %v749 = vld [vmem:[%s12] sm:$0x1]
    %v751 = vlaneseq
    %v752 = vshrl.u32 %v751, 7
    %v753 = vsub.s32 0, %v752
    %v754 = vrot.slane %v749, %v753
    %v756 = vadd.f32 %v748, %v754
    %v757 = vxor.u32 %v756, 2147483648
    %v758 = vmul.f32 %v757, 1.442695
    %v759 = vpow.pop %v758
    %v760 = vadd.f32 %v759, 1.0
    %v761 = vrcp.pop %v760
    %v762 = vmul.f32 1.0, %v761
    %v763 = vtanh.pop %v756
    %v764 = vld [vmem:[%s3] sm:$0x3]
    %766 = vrot.lane.b32.xlu0 %v764, 32
    %v767 = vpop.permute.xlu0 %766
    %v769 = vmul.f32 %v762, %v767
    %771 = vrot.lane.b32.xlu0 %v763, 64
    %v772 = vpop.permute.xlu0 %771
    %v774 = vmul.f32 %v762, %v772
    %776 = vrot.lane.b32.xlu0 %v774, 32
    %v777 = vpop.permute.xlu0 %776
    %v779 = vadd.f32 %v769, %v777
    %v780 = vtanh.pop %v779
    %782 = vrot.lane.b32.xlu0 %v780, 64
    %v783 = vpop.permute.xlu0 %782
    %v785 = vmul.f32 %v762, %v783
    %787 = vrot.lane.b32.xlu0 %v785, 32
    %v788 = vpop.permute.xlu0 %787
    %vm790 = vcmask 254976
    %791 = vst.msk [vmem:[#allocation17] sm:$0x3] %vm790, %v788
    %793 = vrot.lane.b32.xlu0 %v779, 96
    %v794 = vpop.permute.xlu0 %793
    %796 = vst.msk [vmem:[#allocation18] sm:$0x3] %vm790, %v794
    // Predicated region
    $region90: #{tpu_custom_call.1} parent=1 // pred_check
      _
    $region91: #{tpu_custom_call.1} parent=1 // pred_check_branch
      %798 = sbr.rel (0) target = $region93
    $region92: #{tpu_custom_call.1} parent=1 // pred_region
      %s800 = ssub.s32 32, 32
      %801 = vsyncadd [#allocation4], %s800
      %s803 = sshll.u32 [#allocation17], 4
      %s804 = int_to_ptr.vmem [resolvable:$true] %s803
      %806 = dma.vmem_to_hbm [thread:$0]  %s804, 32, %s13, [#allocation4]
    $region93: #{tpu_custom_call.1} parent=1 // pred_fallthru
      _
    // Predicated region
    $region94: #{tpu_custom_call.1} parent=1 // pred_check
      _
    $region95: #{tpu_custom_call.1} parent=1 // pred_check_branch
      %808 = sbr.rel (0) target = $region97
    $region96: #{tpu_custom_call.1} parent=1 // pred_region
      %s810 = ssub.s32 32, 32
      %811 = vsyncadd [#allocation19], %s810
      %s813 = sshll.u32 [#allocation18], 4
      %s814 = int_to_ptr.vmem [resolvable:$true] %s813
      %816 = dma.vmem_to_hbm [thread:$0]  %s814, 32, %s14, [#allocation19]
    $region97: #{tpu_custom_call.1} parent=1 // pred_fallthru
      _
    // Predicated region
    $region98: #{tpu_custom_call.1} parent=1 // pred_check
      _
    $region99: #{tpu_custom_call.1} parent=1 // pred_check_branch
      %818 = sbr.rel (0) target = $region101
    $region100: #{tpu_custom_call.1} parent=1 // pred_region
      %819 = dma.done [#allocation4], 32
    $region101: #{tpu_custom_call.1} parent=1 // pred_fallthru
      _
    // Predicated region
    $region102: #{tpu_custom_call.1} parent=1 // pred_check
      _
    $region103: #{tpu_custom_call.1} parent=1 // pred_check_branch
      %821 = sbr.rel (0) target = $region105
    $region104: #{tpu_custom_call.1} parent=1 // pred_region
      %822 = dma.done [#allocation19], 32
    $region105: #{tpu_custom_call.1} parent=1 // pred_fallthru
      _
    %823 = vsyncpa [#allocation3], 1
    %824 = vsyncpa [#allocation6], 1
    %825 = vsyncpa [#allocation9], 1
    %826 = vsyncpa [#allocation12], 1
    %827 = vsyncpa [#allocation15], 1
    %828 = vsyncpa [#allocation4], 1
    %829 = vsyncpa [#allocation19], 1

</llo_original>
